<compile_context>
chip_gen: v7x
topology: tpu7x:2x2x1
jax: 0.10.0
libtpu: 0.0.40
codegen_flags: <defaults>
</compile_context>

<pallas_src>
import jax
import jax.numpy as jnp
import numpy as np
from jax.experimental import pallas as pl
from jax.experimental.pallas import tpu as pltpu

# ----------------------------- configuration --------------------------------
INPUT_PAR_SIZE = 4
ADDITIONAL_DIM = 2
D_REAL = INPUT_PAR_SIZE + ADDITIONAL_DIM     # full (augmented) feature dim = 6
D_PAD = 8                                    # padded to an exact sublane tile
N_BLOCK = 3                                  # number of coupling layers
HIDDEN_SIZE = 32
HIDDEN_LAYERS = 2
H2 = 2 * HIDDEN_SIZE                         # fused (scale||shift) hidden width
BATCH = 512
TILE_B = 256                                 # batch tile on the lane axis


# ------------------------------ Pallas kernel -------------------------------
def _mynvp_kernel(x_ref,
                  wi_ref, bi_ref, wh_ref, bh_ref, wo_ref, bo_ref,
                  u_ref, det_ref):
    x = x_ref[...]                                        # (D_PAD, TB) f32, batch on lanes
    logdet = jnp.zeros_like(x)

    for blk in range(N_BLOCK):                            # static unrolled loop
        # ---- fused scale||shift MLP: (2H, D_PAD)@(D_PAD, TB); mask folded in wi ----
        h = jnp.dot(wi_ref[blk], x,
                    preferred_element_type=jnp.float32) + bi_ref[blk]       # (2H, TB)
        for l in range(HIDDEN_LAYERS):
            # sublane-aligned split at row 32: tanh on the scale half only,
            # relu on the shift half only (half the EUP work, no vsel).
            h = jnp.concatenate(
                [jnp.tanh(h[:HIDDEN_SIZE]),
                 jnp.maximum(h[HIDDEN_SIZE:], 0.0)], axis=0)
            h = jnp.dot(wh_ref[blk, l], h,
                        preferred_element_type=jnp.float32) + bh_ref[blk, l]

        # ---- single fused output head: rows [0:D_PAD)=s, [D_PAD:2*D_PAD)=t ----
        # (1 - mask) already folded in -> s = t = 0 on keep rows and on pad rows.
        st = jnp.dot(wo_ref[blk], h,
                     preferred_element_type=jnp.float32) + bo_ref[blk]      # (2*D_PAD, TB)
        s = st[:D_PAD]
        t = st[D_PAD:]

        # ---- coupling transform + log-det (no selects needed) ----
        x = jnp.exp(-s) * (x - t)
        logdet = logdet - s

    u_ref[...] = x
    det_ref[...] = logdet


def _resident_spec(arr):
    """Whole-array VMEM-resident block with a constant index_map (fetched once)."""
    nd = arr.ndim
    return pl.BlockSpec(arr.shape, lambda i, _nd=nd: (0,) * _nd)


def mynvp_forward(x, kp, *, tile_b=TILE_B):
    """x: (B, D_REAL) f32.  kp: fused kernel params (see build_kernel_params)."""
    B, Dx = x.shape
    assert Dx == D_REAL
    n_tiles = max(1, -(-B // tile_b))
    B_pad = n_tiles * tile_b

    # Transposed layout: batch on the lane (fast) axis; pad D to 8 sublanes and
    # batch up to the tile boundary (no batch pad when B % tile_b == 0).
    xT = jnp.pad(x.T.astype(jnp.float32),
                 ((0, D_PAD - D_REAL), (0, B_pad - B)))

    x_spec = pl.BlockSpec((D_PAD, tile_b), lambda i: (0, i))
    weight_args = (kp["wi"], kp["bi"], kp["wh"], kp["bh"], kp["wo"], kp["bo"])

    uT, detT = pl.pallas_call(
        _mynvp_kernel,
        out_shape=(jax.ShapeDtypeStruct((D_PAD, B_pad), jnp.float32),   # u^T
                   jax.ShapeDtypeStruct((D_PAD, B_pad), jnp.float32)),  # logdet^T
        grid=(n_tiles,),
        in_specs=[x_spec] + [_resident_spec(a) for a in weight_args],
        out_specs=(x_spec, x_spec),
        compiler_params=pltpu.CompilerParams(
            dimension_semantics=("parallel",)),   # shard batch tiles across TCs
    )(xT, *weight_args)

    return uT[:D_REAL, :B].T, detT[:D_REAL, :B].T


# -------------------------- parameter construction --------------------------
def init_raw_params(key):
    """Deterministic synthetic weights in PyTorch-equivalent (in, out) layout."""
    ks = jax.random.split(key, 12)

    def rnd(k, shape, scale=0.3):
        return (scale * jax.random.normal(k, shape)).astype(jnp.float32)

    H, L, NB, D = HIDDEN_SIZE, HIDDEN_LAYERS, N_BLOCK, D_REAL
    return dict(
        sWi=rnd(ks[0], (NB, D, H)),    sbi=rnd(ks[1], (NB, H)),
        sWh=rnd(ks[2], (NB, L, H, H)), sbh=rnd(ks[3], (NB, L, H)),
        sWo=rnd(ks[4], (NB, H, D)),    sbo=rnd(ks[5], (NB, D)),
        tWi=rnd(ks[6], (NB, D, H)),    tbi=rnd(ks[7], (NB, H)),
        tWh=rnd(ks[8], (NB, L, H, H)), tbh=rnd(ks[9], (NB, L, H)),
        tWo=rnd(ks[10], (NB, H, D)),   tbo=rnd(ks[11], (NB, D)),
    )


def make_masks():
    """mask = arange(D) % 2, flipped between consecutive coupling blocks."""
    base = (np.arange(D_REAL) % 2).astype(np.float32)
    rows, m = [], base
    for _ in range(N_BLOCK):
        rows.append(m.copy())
        m = 1.0 - m
    return jnp.asarray(np.stack(rows))            # (NB, D_REAL)


def build_kernel_params(p, masks):
    """Fused / transposed / mask-folded / D-padded weights for the kernel."""
    NB, L, H = N_BLOCK, HIDDEN_LAYERS, HIDDEN_SIZE
    keep = masks                                  # (NB, D_REAL) -- 1 on kept rows
    xform = 1.0 - masks                           # 1 on transformed rows
    pad_cols = ((0, 0), (0, 0), (0, D_PAD - D_REAL))
    pad_rows = ((0, 0), (0, D_PAD - D_REAL), (0, 0))
    pad_bias = ((0, 0), (0, D_PAD - D_REAL))

    # --- input layer: concat(scale, shift) along out-dim, transposed, mask folded,
    #     feature axis zero-padded to D_PAD.
    wiT = jnp.concatenate([jnp.swapaxes(p["sWi"], 1, 2),
                           jnp.swapaxes(p["tWi"], 1, 2)], axis=1)     # (NB, 2H, D)
    wiT = jnp.pad(wiT * keep[:, None, :], pad_cols)                   # (NB, 2H, D_PAD)
    biT = jnp.concatenate([p["sbi"], p["tbi"]], axis=1)[:, :, None]   # (NB, 2H, 1)

    # --- hidden layers: block-diagonal(scale^T, shift^T)
    sWhT = jnp.swapaxes(p["sWh"], -1, -2)
    tWhT = jnp.swapaxes(p["tWh"], -1, -2)
    z = jnp.zeros_like(sWhT)
    whT = jnp.concatenate([jnp.concatenate([sWhT, z], axis=-1),
                           jnp.concatenate([z, tWhT], axis=-1)], axis=-2)  # (NB,L,2H,2H)
    bhT = jnp.concatenate([p["sbh"], p["tbh"]], axis=-1)[..., None]        # (NB,L,2H,1)

    # --- single fused output head [s; t]: each half zero-padded to read only its
    #     own half of h, (1-mask) folded into rows+biases, feature axis padded.
    zH = jnp.zeros((NB, D_REAL, H), jnp.float32)
    woS = jnp.concatenate([jnp.swapaxes(p["sWo"], 1, 2), zH], axis=-1)     # (NB, D, 2H)
    woT = jnp.concatenate([zH, jnp.swapaxes(p["tWo"], 1, 2)], axis=-1)
    woS = jnp.pad(woS * xform[:, :, None], pad_rows)                       # (NB, D_PAD, 2H)
    woT = jnp.pad(woT * xform[:, :, None], pad_rows)
    wo = jnp.concatenate([woS, woT], axis=1)                               # (NB, 2*D_PAD, 2H)

    boS = jnp.pad(p["sbo"] * xform, pad_bias)                              # (NB, D_PAD)
    boT = jnp.pad(p["tbo"] * xform, pad_bias)
    bo = jnp.concatenate([boS, boT], axis=1)[:, :, None]                   # (NB, 2*D_PAD, 1)

    return dict(wi=wiT, bi=biT, wh=whT, bh=bhT, wo=wo, bo=bo)


# ----------------------------- pure-JAX reference ----------------------------
def reference_forward(x, masks, p):
    """Direct transcription of the PyTorch module (batch-major, unfused)."""
    logdet = jnp.zeros_like(x)
    for blk in range(N_BLOCK):
        mask = masks[blk]
        mx = x * mask
        h = mx @ p["sWi"][blk] + p["sbi"][blk]
        for l in range(HIDDEN_LAYERS):
            h = jnp.tanh(h)
            h = h @ p["sWh"][blk, l] + p["sbh"][blk, l]
        s = h @ p["sWo"][blk] + p["sbo"][blk]
        h = mx @ p["tWi"][blk] + p["tbi"][blk]
        for l in range(HIDDEN_LAYERS):
            h = jnp.maximum(h, 0.0)
            h = h @ p["tWh"][blk, l] + p["tbh"][blk, l]
        t = h @ p["tWo"][blk] + p["tbo"][blk]
        u = mx + (1.0 - mask) * (jnp.exp(-s) * (x - t))
        logdet = logdet + (1.0 - mask) * (-s)
        x = u
    return x, logdet


# ----------------------------------- main ------------------------------------
if __name__ == "__main__":
    key = jax.random.PRNGKey(0)
    k_x, k_p = jax.random.split(key)

    x = jax.random.normal(k_x, (BATCH, D_REAL), dtype=jnp.float32)
    raw = init_raw_params(k_p)
    masks = make_masks()
    kp = build_kernel_params(raw, masks)

    u, det = mynvp_forward(x, kp, tile_b=TILE_B)
    u = jax.block_until_ready(u)
    det = jax.block_until_ready(det)

    u_ref, det_ref = reference_forward(x, masks, raw)
    np.testing.assert_allclose(np.asarray(u), np.asarray(u_ref),
                               rtol=1e-3, atol=1e-4)
    np.testing.assert_allclose(np.asarray(det), np.asarray(det_ref),
                               rtol=1e-3, atol=1e-4)

    print("KERNEL_OK")
</pallas_src>

<mosaic_0001>
module attributes {stable_mosaic.version = 11 : i64} {
  func.func @_mynvp_kernel(%arg0: i32, %arg1: memref<8x256xf32, #tpu.memory_space<vmem>>, %arg2: memref<3x64x8xf32, #tpu.memory_space<vmem>>, %arg3: memref<3x64x1xf32, #tpu.memory_space<vmem>>, %arg4: memref<3x2x64x64xf32, #tpu.memory_space<vmem>>, %arg5: memref<3x2x64x1xf32, #tpu.memory_space<vmem>>, %arg6: memref<3x16x64xf32, #tpu.memory_space<vmem>>, %arg7: memref<3x16x1xf32, #tpu.memory_space<vmem>>, %arg8: memref<8x256xf32, #tpu.memory_space<vmem>>, %arg9: memref<8x256xf32, #tpu.memory_space<vmem>>) attributes {dimension_semantics = [#tpu.dimension_semantics<parallel>], iteration_bounds = array<i64: 2>, scalar_prefetch = 0 : i64, scratch_operands = 0 : i64, tpu.core_type = #tpu.core_type<tc>, window_params = [{transform_indices = @transform_0, window_bounds = array<i64: 8, 256>}, {pipeline_mode = #tpu.pipeline_mode<synchronous>, transform_indices = @transform_1, window_bounds = array<i64: 3, 64, 8>}, {pipeline_mode = #tpu.pipeline_mode<synchronous>, transform_indices = @transform_2, window_bounds = array<i64: 3, 64, 1>}, {pipeline_mode = #tpu.pipeline_mode<synchronous>, transform_indices = @transform_3, window_bounds = array<i64: 3, 2, 64, 64>}, {pipeline_mode = #tpu.pipeline_mode<synchronous>, transform_indices = @transform_4, window_bounds = array<i64: 3, 2, 64, 1>}, {pipeline_mode = #tpu.pipeline_mode<synchronous>, transform_indices = @transform_5, window_bounds = array<i64: 3, 16, 64>}, {pipeline_mode = #tpu.pipeline_mode<synchronous>, transform_indices = @transform_6, window_bounds = array<i64: 3, 16, 1>}, {transform_indices = @transform_7, window_bounds = array<i64: 8, 256>}, {transform_indices = @transform_8, window_bounds = array<i64: 8, 256>}]} {
    %c0 = arith.constant 0 : index
    %c0_0 = arith.constant 0 : index
    %0 = vector.load %arg1[%c0, %c0_0] : memref<8x256xf32, #tpu.memory_space<vmem>>, vector<8x256xf32>
    %cst = arith.constant 0.000000e+00 : f32
    %1 = vector.broadcast %cst : f32 to vector<8x256xf32>
    %c0_1 = arith.constant 0 : index
    %c0_2 = arith.constant 0 : index
    %c0_3 = arith.constant 0 : index
    %2 = vector.load %arg2[%c0_1, %c0_2, %c0_3] : memref<3x64x8xf32, #tpu.memory_space<vmem>>, vector<1x64x8xf32>
    %3 = vector.shape_cast %2 : vector<1x64x8xf32> to vector<64x8xf32>
    %cst_4 = arith.constant dense<0.000000e+00> : vector<64x256xf32>
    %4 = tpu.matmul %3, %0, %cst_4 {dimension_numbers = #tpu.dot_dimension_numbers<[1], [0], [0], [1], [0, 0, 1, 1], [], []>} : vector<64x8xf32>, vector<8x256xf32>, vector<64x256xf32> -> vector<64x256xf32>
    %c0_5 = arith.constant 0 : index
    %c0_6 = arith.constant 0 : index
    %c0_7 = arith.constant 0 : index
    %5 = vector.load %arg3[%c0_5, %c0_6, %c0_7] : memref<3x64x1xf32, #tpu.memory_space<vmem>>, vector<1x64x1xf32>
    %6 = vector.shape_cast %5 : vector<1x64x1xf32> to vector<64x1xf32>
    %7 = vector.broadcast %6 : vector<64x1xf32> to vector<64x256xf32>
    %8 = arith.addf %4, %7 : vector<64x256xf32>
    %9 = vector.extract_strided_slice %8 {offsets = [0, 0], sizes = [32, 256], strides = [1, 1]} : vector<64x256xf32> to vector<32x256xf32>
    %10 = math.tanh %9 : vector<32x256xf32>
    %11 = vector.extract_strided_slice %8 {offsets = [32, 0], sizes = [32, 256], strides = [1, 1]} : vector<64x256xf32> to vector<32x256xf32>
    %cst_8 = arith.constant 0.000000e+00 : f32
    %12 = vector.broadcast %cst_8 : f32 to vector<32x256xf32>
    %13 = arith.maximumf %11, %12 : vector<32x256xf32>
    %14 = tpu.concatenate %10, %13 in 0 : vector<32x256xf32>, vector<32x256xf32> -> vector<64x256xf32>
    %c0_9 = arith.constant 0 : index
    %c0_10 = arith.constant 0 : index
    %c0_11 = arith.constant 0 : index
    %c0_12 = arith.constant 0 : index
    %15 = vector.load %arg4[%c0_9, %c0_10, %c0_11, %c0_12] : memref<3x2x64x64xf32, #tpu.memory_space<vmem>>, vector<1x1x64x64xf32>
    %16 = vector.shape_cast %15 : vector<1x1x64x64xf32> to vector<64x64xf32>
    %cst_13 = arith.constant dense<0.000000e+00> : vector<64x256xf32>
    %17 = tpu.matmul %16, %14, %cst_13 {dimension_numbers = #tpu.dot_dimension_numbers<[1], [0], [0], [1], [0, 0, 1, 1], [], []>} : vector<64x64xf32>, vector<64x256xf32>, vector<64x256xf32> -> vector<64x256xf32>
    %c0_14 = arith.constant 0 : index
    %c0_15 = arith.constant 0 : index
    %c0_16 = arith.constant 0 : index
    %c0_17 = arith.constant 0 : index
    %18 = vector.load %arg5[%c0_14, %c0_15, %c0_16, %c0_17] : memref<3x2x64x1xf32, #tpu.memory_space<vmem>>, vector<1x1x64x1xf32>
    %19 = vector.shape_cast %18 : vector<1x1x64x1xf32> to vector<64x1xf32>
    %20 = vector.broadcast %19 : vector<64x1xf32> to vector<64x256xf32>
    %21 = arith.addf %17, %20 : vector<64x256xf32>
    %22 = vector.extract_strided_slice %21 {offsets = [0, 0], sizes = [32, 256], strides = [1, 1]} : vector<64x256xf32> to vector<32x256xf32>
    %23 = math.tanh %22 : vector<32x256xf32>
    %24 = vector.extract_strided_slice %21 {offsets = [32, 0], sizes = [32, 256], strides = [1, 1]} : vector<64x256xf32> to vector<32x256xf32>
    %cst_18 = arith.constant 0.000000e+00 : f32
    %25 = vector.broadcast %cst_18 : f32 to vector<32x256xf32>
    %26 = arith.maximumf %24, %25 : vector<32x256xf32>
    %27 = tpu.concatenate %23, %26 in 0 : vector<32x256xf32>, vector<32x256xf32> -> vector<64x256xf32>
    %c0_19 = arith.constant 0 : index
    %c1 = arith.constant 1 : index
    %c0_20 = arith.constant 0 : index
    %c0_21 = arith.constant 0 : index
    %28 = vector.load %arg4[%c0_19, %c1, %c0_20, %c0_21] : memref<3x2x64x64xf32, #tpu.memory_space<vmem>>, vector<1x1x64x64xf32>
    %29 = vector.shape_cast %28 : vector<1x1x64x64xf32> to vector<64x64xf32>
    %cst_22 = arith.constant dense<0.000000e+00> : vector<64x256xf32>
    %30 = tpu.matmul %29, %27, %cst_22 {dimension_numbers = #tpu.dot_dimension_numbers<[1], [0], [0], [1], [0, 0, 1, 1], [], []>} : vector<64x64xf32>, vector<64x256xf32>, vector<64x256xf32> -> vector<64x256xf32>
    %c0_23 = arith.constant 0 : index
    %c1_24 = arith.constant 1 : index
    %c0_25 = arith.constant 0 : index
    %c0_26 = arith.constant 0 : index
    %31 = vector.load %arg5[%c0_23, %c1_24, %c0_25, %c0_26] : memref<3x2x64x1xf32, #tpu.memory_space<vmem>>, vector<1x1x64x1xf32>
    %32 = vector.shape_cast %31 : vector<1x1x64x1xf32> to vector<64x1xf32>
    %33 = vector.broadcast %32 : vector<64x1xf32> to vector<64x256xf32>
    %34 = arith.addf %30, %33 : vector<64x256xf32>
    %c0_27 = arith.constant 0 : index
    %c0_28 = arith.constant 0 : index
    %c0_29 = arith.constant 0 : index
    %35 = vector.load %arg6[%c0_27, %c0_28, %c0_29] : memref<3x16x64xf32, #tpu.memory_space<vmem>>, vector<1x16x64xf32>
    %36 = vector.shape_cast %35 : vector<1x16x64xf32> to vector<16x64xf32>
    %cst_30 = arith.constant dense<0.000000e+00> : vector<16x256xf32>
    %37 = tpu.matmul %36, %34, %cst_30 {dimension_numbers = #tpu.dot_dimension_numbers<[1], [0], [0], [1], [0, 0, 1, 1], [], []>} : vector<16x64xf32>, vector<64x256xf32>, vector<16x256xf32> -> vector<16x256xf32>
    %c0_31 = arith.constant 0 : index
    %c0_32 = arith.constant 0 : index
    %c0_33 = arith.constant 0 : index
    %38 = vector.load %arg7[%c0_31, %c0_32, %c0_33] : memref<3x16x1xf32, #tpu.memory_space<vmem>>, vector<1x16x1xf32>
    %39 = vector.shape_cast %38 : vector<1x16x1xf32> to vector<16x1xf32>
    %40 = vector.broadcast %39 : vector<16x1xf32> to vector<16x256xf32>
    %41 = arith.addf %37, %40 : vector<16x256xf32>
    %42 = vector.extract_strided_slice %41 {offsets = [0, 0], sizes = [8, 256], strides = [1, 1]} : vector<16x256xf32> to vector<8x256xf32>
    %43 = vector.extract_strided_slice %41 {offsets = [8, 0], sizes = [8, 256], strides = [1, 1]} : vector<16x256xf32> to vector<8x256xf32>
    %cst_34 = arith.constant 0.000000e+00 : f32
    %44 = vector.broadcast %cst_34 : f32 to vector<8x256xf32>
    %45 = arith.subf %44, %42 : vector<8x256xf32>
    %46 = math.exp %45 : vector<8x256xf32>
    %47 = arith.subf %0, %43 : vector<8x256xf32>
    %48 = arith.mulf %46, %47 : vector<8x256xf32>
    %49 = arith.subf %1, %42 : vector<8x256xf32>
    %c1_35 = arith.constant 1 : index
    %c0_36 = arith.constant 0 : index
    %c0_37 = arith.constant 0 : index
    %50 = vector.load %arg2[%c1_35, %c0_36, %c0_37] : memref<3x64x8xf32, #tpu.memory_space<vmem>>, vector<1x64x8xf32>
    %51 = vector.shape_cast %50 : vector<1x64x8xf32> to vector<64x8xf32>
    %cst_38 = arith.constant dense<0.000000e+00> : vector<64x256xf32>
    %52 = tpu.matmul %51, %48, %cst_38 {dimension_numbers = #tpu.dot_dimension_numbers<[1], [0], [0], [1], [0, 0, 1, 1], [], []>} : vector<64x8xf32>, vector<8x256xf32>, vector<64x256xf32> -> vector<64x256xf32>
    %c1_39 = arith.constant 1 : index
    %c0_40 = arith.constant 0 : index
    %c0_41 = arith.constant 0 : index
    %53 = vector.load %arg3[%c1_39, %c0_40, %c0_41] : memref<3x64x1xf32, #tpu.memory_space<vmem>>, vector<1x64x1xf32>
    %54 = vector.shape_cast %53 : vector<1x64x1xf32> to vector<64x1xf32>
    %55 = vector.broadcast %54 : vector<64x1xf32> to vector<64x256xf32>
    %56 = arith.addf %52, %55 : vector<64x256xf32>
    %57 = vector.extract_strided_slice %56 {offsets = [0, 0], sizes = [32, 256], strides = [1, 1]} : vector<64x256xf32> to vector<32x256xf32>
    %58 = math.tanh %57 : vector<32x256xf32>
    %59 = vector.extract_strided_slice %56 {offsets = [32, 0], sizes = [32, 256], strides = [1, 1]} : vector<64x256xf32> to vector<32x256xf32>
    %cst_42 = arith.constant 0.000000e+00 : f32
    %60 = vector.broadcast %cst_42 : f32 to vector<32x256xf32>
    %61 = arith.maximumf %59, %60 : vector<32x256xf32>
    %62 = tpu.concatenate %58, %61 in 0 : vector<32x256xf32>, vector<32x256xf32> -> vector<64x256xf32>
    %c1_43 = arith.constant 1 : index
    %c0_44 = arith.constant 0 : index
    %c0_45 = arith.constant 0 : index
    %c0_46 = arith.constant 0 : index
    %63 = vector.load %arg4[%c1_43, %c0_44, %c0_45, %c0_46] : memref<3x2x64x64xf32, #tpu.memory_space<vmem>>, vector<1x1x64x64xf32>
    %64 = vector.shape_cast %63 : vector<1x1x64x64xf32> to vector<64x64xf32>
    %cst_47 = arith.constant dense<0.000000e+00> : vector<64x256xf32>
    %65 = tpu.matmul %64, %62, %cst_47 {dimension_numbers = #tpu.dot_dimension_numbers<[1], [0], [0], [1], [0, 0, 1, 1], [], []>} : vector<64x64xf32>, vector<64x256xf32>, vector<64x256xf32> -> vector<64x256xf32>
    %c1_48 = arith.constant 1 : index
    %c0_49 = arith.constant 0 : index
    %c0_50 = arith.constant 0 : index
    %c0_51 = arith.constant 0 : index
    %66 = vector.load %arg5[%c1_48, %c0_49, %c0_50, %c0_51] : memref<3x2x64x1xf32, #tpu.memory_space<vmem>>, vector<1x1x64x1xf32>
    %67 = vector.shape_cast %66 : vector<1x1x64x1xf32> to vector<64x1xf32>
    %68 = vector.broadcast %67 : vector<64x1xf32> to vector<64x256xf32>
    %69 = arith.addf %65, %68 : vector<64x256xf32>
    %70 = vector.extract_strided_slice %69 {offsets = [0, 0], sizes = [32, 256], strides = [1, 1]} : vector<64x256xf32> to vector<32x256xf32>
    %71 = math.tanh %70 : vector<32x256xf32>
    %72 = vector.extract_strided_slice %69 {offsets = [32, 0], sizes = [32, 256], strides = [1, 1]} : vector<64x256xf32> to vector<32x256xf32>
    %cst_52 = arith.constant 0.000000e+00 : f32
    %73 = vector.broadcast %cst_52 : f32 to vector<32x256xf32>
    %74 = arith.maximumf %72, %73 : vector<32x256xf32>
    %75 = tpu.concatenate %71, %74 in 0 : vector<32x256xf32>, vector<32x256xf32> -> vector<64x256xf32>
    %c1_53 = arith.constant 1 : index
    %c1_54 = arith.constant 1 : index
    %c0_55 = arith.constant 0 : index
    %c0_56 = arith.constant 0 : index
    %76 = vector.load %arg4[%c1_53, %c1_54, %c0_55, %c0_56] : memref<3x2x64x64xf32, #tpu.memory_space<vmem>>, vector<1x1x64x64xf32>
    %77 = vector.shape_cast %76 : vector<1x1x64x64xf32> to vector<64x64xf32>
    %cst_57 = arith.constant dense<0.000000e+00> : vector<64x256xf32>
    %78 = tpu.matmul %77, %75, %cst_57 {dimension_numbers = #tpu.dot_dimension_numbers<[1], [0], [0], [1], [0, 0, 1, 1], [], []>} : vector<64x64xf32>, vector<64x256xf32>, vector<64x256xf32> -> vector<64x256xf32>
    %c1_58 = arith.constant 1 : index
    %c1_59 = arith.constant 1 : index
    %c0_60 = arith.constant 0 : index
    %c0_61 = arith.constant 0 : index
    %79 = vector.load %arg5[%c1_58, %c1_59, %c0_60, %c0_61] : memref<3x2x64x1xf32, #tpu.memory_space<vmem>>, vector<1x1x64x1xf32>
    %80 = vector.shape_cast %79 : vector<1x1x64x1xf32> to vector<64x1xf32>
    %81 = vector.broadcast %80 : vector<64x1xf32> to vector<64x256xf32>
    %82 = arith.addf %78, %81 : vector<64x256xf32>
    %c1_62 = arith.constant 1 : index
    %c0_63 = arith.constant 0 : index
    %c0_64 = arith.constant 0 : index
    %83 = vector.load %arg6[%c1_62, %c0_63, %c0_64] : memref<3x16x64xf32, #tpu.memory_space<vmem>>, vector<1x16x64xf32>
    %84 = vector.shape_cast %83 : vector<1x16x64xf32> to vector<16x64xf32>
    %cst_65 = arith.constant dense<0.000000e+00> : vector<16x256xf32>
    %85 = tpu.matmul %84, %82, %cst_65 {dimension_numbers = #tpu.dot_dimension_numbers<[1], [0], [0], [1], [0, 0, 1, 1], [], []>} : vector<16x64xf32>, vector<64x256xf32>, vector<16x256xf32> -> vector<16x256xf32>
    %c1_66 = arith.constant 1 : index
    %c0_67 = arith.constant 0 : index
    %c0_68 = arith.constant 0 : index
    %86 = vector.load %arg7[%c1_66, %c0_67, %c0_68] : memref<3x16x1xf32, #tpu.memory_space<vmem>>, vector<1x16x1xf32>
    %87 = vector.shape_cast %86 : vector<1x16x1xf32> to vector<16x1xf32>
    %88 = vector.broadcast %87 : vector<16x1xf32> to vector<16x256xf32>
    %89 = arith.addf %85, %88 : vector<16x256xf32>
    %90 = vector.extract_strided_slice %89 {offsets = [0, 0], sizes = [8, 256], strides = [1, 1]} : vector<16x256xf32> to vector<8x256xf32>
    %91 = vector.extract_strided_slice %89 {offsets = [8, 0], sizes = [8, 256], strides = [1, 1]} : vector<16x256xf32> to vector<8x256xf32>
    %cst_69 = arith.constant 0.000000e+00 : f32
    %92 = vector.broadcast %cst_69 : f32 to vector<8x256xf32>
    %93 = arith.subf %92, %90 : vector<8x256xf32>
    %94 = math.exp %93 : vector<8x256xf32>
    %95 = arith.subf %48, %91 : vector<8x256xf32>
    %96 = arith.mulf %94, %95 : vector<8x256xf32>
    %97 = arith.subf %49, %90 : vector<8x256xf32>
    %c2 = arith.constant 2 : index
    %c0_70 = arith.constant 0 : index
    %c0_71 = arith.constant 0 : index
    %98 = vector.load %arg2[%c2, %c0_70, %c0_71] : memref<3x64x8xf32, #tpu.memory_space<vmem>>, vector<1x64x8xf32>
    %99 = vector.shape_cast %98 : vector<1x64x8xf32> to vector<64x8xf32>
    %cst_72 = arith.constant dense<0.000000e+00> : vector<64x256xf32>
    %100 = tpu.matmul %99, %96, %cst_72 {dimension_numbers = #tpu.dot_dimension_numbers<[1], [0], [0], [1], [0, 0, 1, 1], [], []>} : vector<64x8xf32>, vector<8x256xf32>, vector<64x256xf32> -> vector<64x256xf32>
    %c2_73 = arith.constant 2 : index
    %c0_74 = arith.constant 0 : index
    %c0_75 = arith.constant 0 : index
    %101 = vector.load %arg3[%c2_73, %c0_74, %c0_75] : memref<3x64x1xf32, #tpu.memory_space<vmem>>, vector<1x64x1xf32>
    %102 = vector.shape_cast %101 : vector<1x64x1xf32> to vector<64x1xf32>
    %103 = vector.broadcast %102 : vector<64x1xf32> to vector<64x256xf32>
    %104 = arith.addf %100, %103 : vector<64x256xf32>
    %105 = vector.extract_strided_slice %104 {offsets = [0, 0], sizes = [32, 256], strides = [1, 1]} : vector<64x256xf32> to vector<32x256xf32>
    %106 = math.tanh %105 : vector<32x256xf32>
    %107 = vector.extract_strided_slice %104 {offsets = [32, 0], sizes = [32, 256], strides = [1, 1]} : vector<64x256xf32> to vector<32x256xf32>
    %cst_76 = arith.constant 0.000000e+00 : f32
    %108 = vector.broadcast %cst_76 : f32 to vector<32x256xf32>
    %109 = arith.maximumf %107, %108 : vector<32x256xf32>
    %110 = tpu.concatenate %106, %109 in 0 : vector<32x256xf32>, vector<32x256xf32> -> vector<64x256xf32>
    %c2_77 = arith.constant 2 : index
    %c0_78 = arith.constant 0 : index
    %c0_79 = arith.constant 0 : index
    %c0_80 = arith.constant 0 : index
    %111 = vector.load %arg4[%c2_77, %c0_78, %c0_79, %c0_80] : memref<3x2x64x64xf32, #tpu.memory_space<vmem>>, vector<1x1x64x64xf32>
    %112 = vector.shape_cast %111 : vector<1x1x64x64xf32> to vector<64x64xf32>
    %cst_81 = arith.constant dense<0.000000e+00> : vector<64x256xf32>
    %113 = tpu.matmul %112, %110, %cst_81 {dimension_numbers = #tpu.dot_dimension_numbers<[1], [0], [0], [1], [0, 0, 1, 1], [], []>} : vector<64x64xf32>, vector<64x256xf32>, vector<64x256xf32> -> vector<64x256xf32>
    %c2_82 = arith.constant 2 : index
    %c0_83 = arith.constant 0 : index
    %c0_84 = arith.constant 0 : index
    %c0_85 = arith.constant 0 : index
    %114 = vector.load %arg5[%c2_82, %c0_83, %c0_84, %c0_85] : memref<3x2x64x1xf32, #tpu.memory_space<vmem>>, vector<1x1x64x1xf32>
    %115 = vector.shape_cast %114 : vector<1x1x64x1xf32> to vector<64x1xf32>
    %116 = vector.broadcast %115 : vector<64x1xf32> to vector<64x256xf32>
    %117 = arith.addf %113, %116 : vector<64x256xf32>
    %118 = vector.extract_strided_slice %117 {offsets = [0, 0], sizes = [32, 256], strides = [1, 1]} : vector<64x256xf32> to vector<32x256xf32>
    %119 = math.tanh %118 : vector<32x256xf32>
    %120 = vector.extract_strided_slice %117 {offsets = [32, 0], sizes = [32, 256], strides = [1, 1]} : vector<64x256xf32> to vector<32x256xf32>
    %cst_86 = arith.constant 0.000000e+00 : f32
    %121 = vector.broadcast %cst_86 : f32 to vector<32x256xf32>
    %122 = arith.maximumf %120, %121 : vector<32x256xf32>
    %123 = tpu.concatenate %119, %122 in 0 : vector<32x256xf32>, vector<32x256xf32> -> vector<64x256xf32>
    %c2_87 = arith.constant 2 : index
    %c1_88 = arith.constant 1 : index
    %c0_89 = arith.constant 0 : index
    %c0_90 = arith.constant 0 : index
    %124 = vector.load %arg4[%c2_87, %c1_88, %c0_89, %c0_90] : memref<3x2x64x64xf32, #tpu.memory_space<vmem>>, vector<1x1x64x64xf32>
    %125 = vector.shape_cast %124 : vector<1x1x64x64xf32> to vector<64x64xf32>
    %cst_91 = arith.constant dense<0.000000e+00> : vector<64x256xf32>
    %126 = tpu.matmul %125, %123, %cst_91 {dimension_numbers = #tpu.dot_dimension_numbers<[1], [0], [0], [1], [0, 0, 1, 1], [], []>} : vector<64x64xf32>, vector<64x256xf32>, vector<64x256xf32> -> vector<64x256xf32>
    %c2_92 = arith.constant 2 : index
    %c1_93 = arith.constant 1 : index
    %c0_94 = arith.constant 0 : index
    %c0_95 = arith.constant 0 : index
    %127 = vector.load %arg5[%c2_92, %c1_93, %c0_94, %c0_95] : memref<3x2x64x1xf32, #tpu.memory_space<vmem>>, vector<1x1x64x1xf32>
    %128 = vector.shape_cast %127 : vector<1x1x64x1xf32> to vector<64x1xf32>
    %129 = vector.broadcast %128 : vector<64x1xf32> to vector<64x256xf32>
    %130 = arith.addf %126, %129 : vector<64x256xf32>
    %c2_96 = arith.constant 2 : index
    %c0_97 = arith.constant 0 : index
    %c0_98 = arith.constant 0 : index
    %131 = vector.load %arg6[%c2_96, %c0_97, %c0_98] : memref<3x16x64xf32, #tpu.memory_space<vmem>>, vector<1x16x64xf32>
    %132 = vector.shape_cast %131 : vector<1x16x64xf32> to vector<16x64xf32>
    %cst_99 = arith.constant dense<0.000000e+00> : vector<16x256xf32>
    %133 = tpu.matmul %132, %130, %cst_99 {dimension_numbers = #tpu.dot_dimension_numbers<[1], [0], [0], [1], [0, 0, 1, 1], [], []>} : vector<16x64xf32>, vector<64x256xf32>, vector<16x256xf32> -> vector<16x256xf32>
    %c2_100 = arith.constant 2 : index
    %c0_101 = arith.constant 0 : index
    %c0_102 = arith.constant 0 : index
    %134 = vector.load %arg7[%c2_100, %c0_101, %c0_102] : memref<3x16x1xf32, #tpu.memory_space<vmem>>, vector<1x16x1xf32>
    %135 = vector.shape_cast %134 : vector<1x16x1xf32> to vector<16x1xf32>
    %136 = vector.broadcast %135 : vector<16x1xf32> to vector<16x256xf32>
    %137 = arith.addf %133, %136 : vector<16x256xf32>
    %138 = vector.extract_strided_slice %137 {offsets = [0, 0], sizes = [8, 256], strides = [1, 1]} : vector<16x256xf32> to vector<8x256xf32>
    %139 = vector.extract_strided_slice %137 {offsets = [8, 0], sizes = [8, 256], strides = [1, 1]} : vector<16x256xf32> to vector<8x256xf32>
    %cst_103 = arith.constant 0.000000e+00 : f32
    %140 = vector.broadcast %cst_103 : f32 to vector<8x256xf32>
    %141 = arith.subf %140, %138 : vector<8x256xf32>
    %142 = math.exp %141 : vector<8x256xf32>
    %143 = arith.subf %96, %139 : vector<8x256xf32>
    %144 = arith.mulf %142, %143 : vector<8x256xf32>
    %145 = arith.subf %97, %138 : vector<8x256xf32>
    %c0_104 = arith.constant 0 : index
    %c0_105 = arith.constant 0 : index
    %146 = vector.load %arg8[%c0_104, %c0_105] : memref<8x256xf32, #tpu.memory_space<vmem>>, vector<8x256xf32>
    tpu.vector_store %arg8[%c0_104, %c0_105], %144 {strides = array<i32>} : memref<8x256xf32, #tpu.memory_space<vmem>>, vector<8x256xf32>,
    %c0_106 = arith.constant 0 : index
    %c0_107 = arith.constant 0 : index
    %147 = vector.load %arg9[%c0_106, %c0_107] : memref<8x256xf32, #tpu.memory_space<vmem>>, vector<8x256xf32>
    tpu.vector_store %arg9[%c0_106, %c0_107], %145 {strides = array<i32>} : memref<8x256xf32, #tpu.memory_space<vmem>>, vector<8x256xf32>,
    return
  }
  func.func @transform_0(%arg0: i32) -> (i32, i32) {
    %c0_i32 = arith.constant 0 : i32
    %c0_i32_0 = arith.constant 0 : i32
    return %c0_i32, %arg0 : i32, i32
  }
  func.func @transform_1(%arg0: i32) -> (i32, i32, i32) {
    %c0_i32 = arith.constant 0 : i32
    %c0_i32_0 = arith.constant 0 : i32
    %c0_i32_1 = arith.constant 0 : i32
    %c0_i32_2 = arith.constant 0 : i32
    return %c0_i32, %c0_i32_0, %c0_i32_1 : i32, i32, i32
  }
  func.func @transform_2(%arg0: i32) -> (i32, i32, i32) {
    %c0_i32 = arith.constant 0 : i32
    %c0_i32_0 = arith.constant 0 : i32
    %c0_i32_1 = arith.constant 0 : i32
    %c0_i32_2 = arith.constant 0 : i32
    return %c0_i32, %c0_i32_0, %c0_i32_1 : i32, i32, i32
  }
  func.func @transform_3(%arg0: i32) -> (i32, i32, i32, i32) {
    %c0_i32 = arith.constant 0 : i32
    %c0_i32_0 = arith.constant 0 : i32
    %c0_i32_1 = arith.constant 0 : i32
    %c0_i32_2 = arith.constant 0 : i32
    %c0_i32_3 = arith.constant 0 : i32
    return %c0_i32, %c0_i32_0, %c0_i32_1, %c0_i32_2 : i32, i32, i32, i32
  }
  func.func @transform_4(%arg0: i32) -> (i32, i32, i32, i32) {
    %c0_i32 = arith.constant 0 : i32
    %c0_i32_0 = arith.constant 0 : i32
    %c0_i32_1 = arith.constant 0 : i32
    %c0_i32_2 = arith.constant 0 : i32
    %c0_i32_3 = arith.constant 0 : i32
    return %c0_i32, %c0_i32_0, %c0_i32_1, %c0_i32_2 : i32, i32, i32, i32
  }
  func.func @transform_5(%arg0: i32) -> (i32, i32, i32) {
    %c0_i32 = arith.constant 0 : i32
    %c0_i32_0 = arith.constant 0 : i32
    %c0_i32_1 = arith.constant 0 : i32
    %c0_i32_2 = arith.constant 0 : i32
    return %c0_i32, %c0_i32_0, %c0_i32_1 : i32, i32, i32
  }
  func.func @transform_6(%arg0: i32) -> (i32, i32, i32) {
    %c0_i32 = arith.constant 0 : i32
    %c0_i32_0 = arith.constant 0 : i32
    %c0_i32_1 = arith.constant 0 : i32
    %c0_i32_2 = arith.constant 0 : i32
    return %c0_i32, %c0_i32_0, %c0_i32_1 : i32, i32, i32
  }
  func.func @transform_7(%arg0: i32) -> (i32, i32) {
    %c0_i32 = arith.constant 0 : i32
    %c0_i32_0 = arith.constant 0 : i32
    return %c0_i32, %arg0 : i32, i32
  }
  func.func @transform_8(%arg0: i32) -> (i32, i32) {
    %c0_i32 = arith.constant 0 : i32
    %c0_i32_0 = arith.constant 0 : i32
    return %c0_i32, %arg0 : i32, i32
  }
}

</mosaic_0001>

<llo_original>
// kernel: tpu_custom_call.1
$region0: #{tpu_custom_call.1}
  #allocation0 [shape = 'u32[]', space=smem, size = 0x4, offset = 0x4, fixed_abs, tag = 'smem constant byte address 0x4 - core index']
  #allocation1 [shape = 'u32[144,128]{1,0:T(1,128)}', space=vmem, size = 0x12000, scoped, tag = 'internal scratch']
  %s0 = inlined_call_operand.vmem [shape: f32[8,512], index: 0, kind: input, shape index: {}]
  %s1 = inlined_call_operand.vmem [shape: f32[3,64,8], index: 1, kind: input, shape index: {}]
  %s2 = inlined_call_operand.vmem [shape: f32[3,64,1], index: 2, kind: input, shape index: {}]
  %s3 = inlined_call_operand.vmem [shape: f32[3,2,64,64], index: 3, kind: input, shape index: {}]
  %s4 = inlined_call_operand.vmem [shape: f32[3,2,64,1], index: 4, kind: input, shape index: {}]
  %s5 = inlined_call_operand.vmem [shape: f32[3,16,64], index: 5, kind: input, shape index: {}]
  %s6 = inlined_call_operand.vmem [shape: f32[3,16,1], index: 6, kind: input, shape index: {}]
  %s7 = inlined_call_operand.hbm [shape: f32[8,512], index: 7, kind: output, shape index: {0}]
  %s8 = inlined_call_operand.hbm [shape: f32[8,512], index: 8, kind: output, shape index: {1}]
  %9 = xla_tuple %s7, %s8
  %s10 = sld [smem:[#allocation0]]
  $region69: #{tpu_custom_call.1} parent=0
    _
  %s12 = ssub.s32 1, %s10
  %s13 = scalar_select 0, %s12, %s10
  $region1: #{tpu_custom_call.1} parent=0
    #allocation2 [shape = 'u8[16384]{0}', space=vmem, size = 0x4000, scoped, tag = 'output window, operand 0']
    #allocation3 [shape = 's32[2]{0}', space=sflag, size = 0x8, scoped, tag = 'scoped memory for tpu_custom_call.1']
    #allocation4 [shape = 'u8[16384]{0}', space=vmem, size = 0x4000, scoped, tag = 'output window, operand 1']
    #allocation5 [shape = 's32[2]{0}', space=sflag, size = 0x8, scoped, tag = 'scoped memory for tpu_custom_call.1']
    %14 = vsyncpa [#allocation3], 0
    %s15 = scalar_lea.sflag [#allocation3], 1
    %16 = vsyncpa %s15, 0
    %17 = vsyncpa [#allocation5], 0
    %s18 = scalar_lea.sflag [#allocation5], 1
    %19 = vsyncpa %s18, 0
    loop: start=0, step=1, limit=4
    $region2: #{tpu_custom_call.1} parent=1 // loop_pre_header
      _
    $region3: #{tpu_custom_call.1} parent=1 // loop_header
      %s21 = sphi 0, %s25
      %p22 = scmp.ge.s32.totalorder %s21, 4
      %s31 = sphi 0, %s33
      %s34 = sphi 0, %s31
      %s35 = sphi 0, %s34
      %s51 = sphi 0, %s35
      %s55 = sphi 0, %s55
      %s57 = sphi 0, %s55
      %s58 = sphi 0, %s57
      %s72 = sphi 0, %s58
      %s76 = sphi 0, %s76
      %s78 = sphi 0, %s76
      %s79 = sphi 0, %s78
      %s93 = sphi 0, %s79
      %s97 = sphi 0, %s97
      %s99 = sphi 0, %s97
      %s100 = sphi 0, %s99
      %s114 = sphi 0, %s100
      %s118 = sphi 0, %s118
      %s120 = sphi 0, %s118
      %s121 = sphi 0, %s120
      %s135 = sphi 0, %s121
      %s139 = sphi 0, %s139
      %s141 = sphi 0, %s139
      %s142 = sphi 0, %s141
      %s156 = sphi 0, %s142
      %s160 = sphi 0, %s160
      %s162 = sphi 0, %s160
      %s163 = sphi 0, %s162
      %s177 = sphi 0, %s163
      %s183 = sphi 0, %s185
      %s186 = sphi 0, %s183
      %s187 = sphi 0, %s186
      %s203 = sphi 0, %s187
      %s209 = sphi 0, %s211
      %s212 = sphi 0, %s209
      %s213 = sphi 0, %s212
      %s229 = sphi 0, %s213
    $region4: #{tpu_custom_call.1} parent=1 // loop_header_branch
      %24 = sbr.rel (%p22) target = $region8
    $region5: #{tpu_custom_call.1} parent=1 // loop_body
      %s26 = ssub.s32 %s21, 1
      %s27 = ssub.s32 %s21, 2
      %s28 = sadd.s32 %s21, 1
      %s29 = ssub.s32 %s21, %s28
      %p30 = scmp.eq.s32.totalorder %s29, 0
      %s32 = sadd.s32 %s31, 1
      %s33 = scalar_select %p30, %s31, %s32
      %p36 = pneg %p30
      %p37 = scmp.eq.s32.totalorder %s21, 1
      %p38 = por %p36, %p37
      %p39 = scmp.ne.s32.totalorder %s31, %s34
      %p40 = scmp.eq.s32.totalorder %s21, 0
      %p41 = por %p39, %p40
      %p42 = scmp.ne.s32.totalorder %s31, %s34
      %p43 = scmp.eq.s32.totalorder %s26, 1
      %p44 = por %p42, %p43
      %p45 = scmp.ne.s32.totalorder %s34, %s35
      %p46 = scmp.eq.s32.totalorder %s26, 0
      %p47 = por %p45, %p46
      %p48 = scmp.ne.s32.totalorder %s34, %s35
      %p49 = scmp.eq.s32.totalorder %s27, 1
      %p50 = por %p48, %p49
      %p52 = scmp.ne.s32.totalorder %s35, %s51
      %p53 = scmp.eq.s32.totalorder %s27, 0
      %p54 = por %p52, %p53
      %s56 = sadd.s32 %s55, 1
      %p59 = scmp.eq.s32.totalorder %s21, 1
      %p60 = scmp.ne.s32.totalorder %s55, %s57
      %p61 = scmp.eq.s32.totalorder %s21, 0
      %p62 = por %p60, %p61
      %p63 = scmp.ne.s32.totalorder %s55, %s57
      %p64 = scmp.eq.s32.totalorder %s26, 1
      %p65 = por %p63, %p64
      %p66 = scmp.ne.s32.totalorder %s57, %s58
      %p67 = scmp.eq.s32.totalorder %s26, 0
      %p68 = por %p66, %p67
      %p69 = scmp.ne.s32.totalorder %s57, %s58
      %p70 = scmp.eq.s32.totalorder %s27, 1
      %p71 = por %p69, %p70
      %p73 = scmp.ne.s32.totalorder %s58, %s72
      %p74 = scmp.eq.s32.totalorder %s27, 0
      %p75 = por %p73, %p74
      %s77 = sadd.s32 %s76, 1
      %p80 = scmp.eq.s32.totalorder %s21, 1
      %p81 = scmp.ne.s32.totalorder %s76, %s78
      %p82 = scmp.eq.s32.totalorder %s21, 0
      %p83 = por %p81, %p82
      %p84 = scmp.ne.s32.totalorder %s76, %s78
      %p85 = scmp.eq.s32.totalorder %s26, 1
      %p86 = por %p84, %p85
      %p87 = scmp.ne.s32.totalorder %s78, %s79
      %p88 = scmp.eq.s32.totalorder %s26, 0
      %p89 = por %p87, %p88
      %p90 = scmp.ne.s32.totalorder %s78, %s79
      %p91 = scmp.eq.s32.totalorder %s27, 1
      %p92 = por %p90, %p91
      %p94 = scmp.ne.s32.totalorder %s79, %s93
      %p95 = scmp.eq.s32.totalorder %s27, 0
      %p96 = por %p94, %p95
      %s98 = sadd.s32 %s97, 1
      %p101 = scmp.eq.s32.totalorder %s21, 1
      %p102 = scmp.ne.s32.totalorder %s97, %s99
      %p103 = scmp.eq.s32.totalorder %s21, 0
      %p104 = por %p102, %p103
      %p105 = scmp.ne.s32.totalorder %s97, %s99
      %p106 = scmp.eq.s32.totalorder %s26, 1
      %p107 = por %p105, %p106
      %p108 = scmp.ne.s32.totalorder %s99, %s100
      %p109 = scmp.eq.s32.totalorder %s26, 0
      %p110 = por %p108, %p109
      %p111 = scmp.ne.s32.totalorder %s99, %s100
      %p112 = scmp.eq.s32.totalorder %s27, 1
      %p113 = por %p111, %p112
      %p115 = scmp.ne.s32.totalorder %s100, %s114
      %p116 = scmp.eq.s32.totalorder %s27, 0
      %p117 = por %p115, %p116
      %s119 = sadd.s32 %s118, 1
      %p122 = scmp.eq.s32.totalorder %s21, 1
      %p123 = scmp.ne.s32.totalorder %s118, %s120
      %p124 = scmp.eq.s32.totalorder %s21, 0
      %p125 = por %p123, %p124
      %p126 = scmp.ne.s32.totalorder %s118, %s120
      %p127 = scmp.eq.s32.totalorder %s26, 1
      %p128 = por %p126, %p127
      %p129 = scmp.ne.s32.totalorder %s120, %s121
      %p130 = scmp.eq.s32.totalorder %s26, 0
      %p131 = por %p129, %p130
      %p132 = scmp.ne.s32.totalorder %s120, %s121
      %p133 = scmp.eq.s32.totalorder %s27, 1
      %p134 = por %p132, %p133
      %p136 = scmp.ne.s32.totalorder %s121, %s135
      %p137 = scmp.eq.s32.totalorder %s27, 0
      %p138 = por %p136, %p137
      %s140 = sadd.s32 %s139, 1
      %p143 = scmp.eq.s32.totalorder %s21, 1
      %p144 = scmp.ne.s32.totalorder %s139, %s141
      %p145 = scmp.eq.s32.totalorder %s21, 0
      %p146 = por %p144, %p145
      %p147 = scmp.ne.s32.totalorder %s139, %s141
      %p148 = scmp.eq.s32.totalorder %s26, 1
      %p149 = por %p147, %p148
      %p150 = scmp.ne.s32.totalorder %s141, %s142
      %p151 = scmp.eq.s32.totalorder %s26, 0
      %p152 = por %p150, %p151
      %p153 = scmp.ne.s32.totalorder %s141, %s142
      %p154 = scmp.eq.s32.totalorder %s27, 1
      %p155 = por %p153, %p154
      %p157 = scmp.ne.s32.totalorder %s142, %s156
      %p158 = scmp.eq.s32.totalorder %s27, 0
      %p159 = por %p157, %p158
      %s161 = sadd.s32 %s160, 1
      %p164 = scmp.eq.s32.totalorder %s21, 1
      %p165 = scmp.ne.s32.totalorder %s160, %s162
      %p166 = scmp.eq.s32.totalorder %s21, 0
      %p167 = por %p165, %p166
      %p168 = scmp.ne.s32.totalorder %s160, %s162
      %p169 = scmp.eq.s32.totalorder %s26, 1
      %p170 = por %p168, %p169
      %p171 = scmp.ne.s32.totalorder %s162, %s163
      %p172 = scmp.eq.s32.totalorder %s26, 0
      %p173 = por %p171, %p172
      %p174 = scmp.ne.s32.totalorder %s162, %s163
      %p175 = scmp.eq.s32.totalorder %s27, 1
      %p176 = por %p174, %p175
      %p178 = scmp.ne.s32.totalorder %s163, %s177
      %p179 = scmp.eq.s32.totalorder %s27, 0
      %p180 = por %p178, %p179
      %s181 = ssub.s32 %s21, %s28
      %p182 = scmp.eq.s32.totalorder %s181, 0
      %s184 = sadd.s32 %s183, 1
      %s185 = scalar_select %p182, %s183, %s184
      %p188 = pneg %p182
      %p189 = scmp.eq.s32.totalorder %s21, 1
      %p190 = por %p188, %p189
      %p191 = scmp.ne.s32.totalorder %s183, %s186
      %p192 = scmp.eq.s32.totalorder %s21, 0
      %p193 = por %p191, %p192
      %p194 = scmp.ne.s32.totalorder %s183, %s186
      %p195 = scmp.eq.s32.totalorder %s26, 1
      %p196 = por %p194, %p195
      %p197 = scmp.ne.s32.totalorder %s186, %s187
      %p198 = scmp.eq.s32.totalorder %s26, 0
      %p199 = por %p197, %p198
      %p200 = scmp.ne.s32.totalorder %s186, %s187
      %p201 = scmp.eq.s32.totalorder %s27, 1
      %p202 = por %p200, %p201
      %p204 = scmp.ne.s32.totalorder %s187, %s203
      %p205 = scmp.eq.s32.totalorder %s27, 0
      %p206 = por %p204, %p205
      %s207 = ssub.s32 %s21, %s28
      %p208 = scmp.eq.s32.totalorder %s207, 0
      %s210 = sadd.s32 %s209, 1
      %s211 = scalar_select %p208, %s209, %s210
      %p214 = pneg %p208
      %p215 = scmp.eq.s32.totalorder %s21, 1
      %p216 = por %p214, %p215
      %p217 = scmp.ne.s32.totalorder %s209, %s212
      %p218 = scmp.eq.s32.totalorder %s21, 0
      %p219 = por %p217, %p218
      %p220 = scmp.ne.s32.totalorder %s209, %s212
      %p221 = scmp.eq.s32.totalorder %s26, 1
      %p222 = por %p220, %p221
      %p223 = scmp.ne.s32.totalorder %s212, %s213
      %p224 = scmp.eq.s32.totalorder %s26, 0
      %p225 = por %p223, %p224
      %p226 = scmp.ne.s32.totalorder %s212, %s213
      %p227 = scmp.eq.s32.totalorder %s27, 1
      %p228 = por %p226, %p227
      %p230 = scmp.ne.s32.totalorder %s213, %s229
      %p231 = scmp.eq.s32.totalorder %s27, 0
      %p232 = por %p230, %p231
      %p233 = scmp.le.s32.totalorder 1, %s21
      %p234 = scmp.lt.s32.totalorder %s21, 3
      %p235 = pnand %p233, %p234
      %p236 = pneg %p235
      // Predicated region
      $region9: #{tpu_custom_call.1} parent=5 // pred_check
        _
      $region10: #{tpu_custom_call.1} parent=5 // pred_check_branch
        %238 = sbr.rel (%p235) target = $region12
      $region11: #{tpu_custom_call.1} parent=5 // pred_region
        %s239 = ssub.s32 %s21, 1
        // Predicated region
        $region13: #{tpu_custom_call.1} parent=11 // pred_check
          %p240 = pneg %p68
        $region14: #{tpu_custom_call.1} parent=11 // pred_check_branch
          %242 = sbr.rel (%p240) target = $region16
        $region15: #{tpu_custom_call.1} parent=11 // pred_region
          _
        $region16: #{tpu_custom_call.1} parent=11 // pred_fallthru
          _
        // Predicated region
        $region17: #{tpu_custom_call.1} parent=11 // pred_check
          %p243 = pneg %p89
        $region18: #{tpu_custom_call.1} parent=11 // pred_check_branch
          %245 = sbr.rel (%p243) target = $region20
        $region19: #{tpu_custom_call.1} parent=11 // pred_region
          _
        $region20: #{tpu_custom_call.1} parent=11 // pred_fallthru
          _
        // Predicated region
        $region21: #{tpu_custom_call.1} parent=11 // pred_check
          %p246 = pneg %p110
        $region22: #{tpu_custom_call.1} parent=11 // pred_check_branch
          %248 = sbr.rel (%p246) target = $region24
        $region23: #{tpu_custom_call.1} parent=11 // pred_region
          _
        $region24: #{tpu_custom_call.1} parent=11 // pred_fallthru
          _
        // Predicated region
        $region25: #{tpu_custom_call.1} parent=11 // pred_check
          %p249 = pneg %p131
        $region26: #{tpu_custom_call.1} parent=11 // pred_check_branch
          %251 = sbr.rel (%p249) target = $region28
        $region27: #{tpu_custom_call.1} parent=11 // pred_region
          _
        $region28: #{tpu_custom_call.1} parent=11 // pred_fallthru
          _
        // Predicated region
        $region29: #{tpu_custom_call.1} parent=11 // pred_check
          %p252 = pneg %p152
        $region30: #{tpu_custom_call.1} parent=11 // pred_check_branch
          %254 = sbr.rel (%p252) target = $region32
        $region31: #{tpu_custom_call.1} parent=11 // pred_region
          _
        $region32: #{tpu_custom_call.1} parent=11 // pred_fallthru
          _
        // Predicated region
        $region33: #{tpu_custom_call.1} parent=11 // pred_check
          %p255 = pneg %p173
        $region34: #{tpu_custom_call.1} parent=11 // pred_check_branch
          %257 = sbr.rel (%p255) target = $region36
        $region35: #{tpu_custom_call.1} parent=11 // pred_region
          _
        $region36: #{tpu_custom_call.1} parent=11 // pred_fallthru
          _
      $region12: #{tpu_custom_call.1} parent=5 // pred_fallthru
        _
      %p258 = scmp.lt.s32.totalorder %s21, 2
      // Predicated region
      $region37: #{tpu_custom_call.1} parent=5 // pred_check
        %p259 = pneg %p258
      $region38: #{tpu_custom_call.1} parent=5 // pred_check_branch
        %261 = sbr.rel (%p259) target = $region40
      $region39: #{tpu_custom_call.1} parent=5 // pred_region
        // Predicated region
        $region41: #{tpu_custom_call.1} parent=39 // pred_check
          %p262 = pneg %p41
        $region42: #{tpu_custom_call.1} parent=39 // pred_check_branch
          %264 = sbr.rel (%p262) target = $region44
        $region43: #{tpu_custom_call.1} parent=39 // pred_region
          %s265 = smul.u32 2, %s21
          %p266 = scmp.lt.s32.totalorder %s265, 3
          %s267 = scalar_select %p266, %s265, 3
          %s268 = smul.addr %s267, 8
          %s269 = scalar_lea.vmem %s0, %s268
          %s270 = smul.u32 2, %s21
        $region44: #{tpu_custom_call.1} parent=39 // pred_fallthru
          _
      $region40: #{tpu_custom_call.1} parent=5 // pred_fallthru
        _
      %p271 = scmp.le.s32.totalorder 1, %s21
      %p272 = scmp.lt.s32.totalorder %s21, 3
      %p273 = pnand %p271, %p272
      %p274 = pneg %p273
      // Predicated region
      $region45: #{tpu_custom_call.1} parent=5 // pred_check
        _
      $region46: #{tpu_custom_call.1} parent=5 // pred_check_branch
        %276 = sbr.rel (%p273) target = $region48
      $region47: #{tpu_custom_call.1} parent=5 // pred_region
        %s277 = ssub.s32 %s21, 1
        %s278 = smul.u32 2, %s26
        %p279 = scmp.lt.s32.totalorder %s278, 3
        %s280 = scalar_select %p279, %s278, 3
        %s281 = smul.addr %s280, 8
        %s282 = scalar_lea.vmem %s0, %s281
        %p283 = pneg %p47
        %p284 = pneg %p44
        %p285 = pneg %p68
        %p286 = pneg %p65
        %p287 = pneg %p89
        %p288 = pneg %p86
        %p289 = pneg %p110
        %p290 = pneg %p107
        %p291 = pneg %p131
        %p292 = pneg %p128
        %p293 = pneg %p152
        %p294 = pneg %p149
        %p295 = pneg %p173
        %p296 = pneg %p170
        %p297 = pneg %p199
        %p298 = pneg %p196
        %s299 = sand.u32 %s186, 1
        %s300 = scalar_lea.sflag [#allocation3], %s299
        %s301 = sand.u32 %s186, 1
        %s302 = smul.addr %s301, 16
        %s303 = scalar_lea.vmem [#allocation2], %s302
        %p304 = pneg %p225
        %p305 = pneg %p222
        %s306 = sand.u32 %s212, 1
        %s307 = scalar_lea.sflag [#allocation5], %s306
        %s308 = sand.u32 %s212, 1
        %s309 = smul.addr %s308, 16
        %s310 = scalar_lea.vmem [#allocation4], %s309
        %s311 = smul.u32 2, %s26
        %p312 = scmp.lt.s32.totalorder %s311, 3
        %s313 = scalar_select %p312, %s311, 3
        %s314 = smul.addr %s313, 8
        %s315 = scalar_lea.vmem %s0, %s314
        %s316 = smul.u32 2, %s26
        %s317 = smul.u32 2, %s26
        %s318 = smul.u32 2, %s26
        %v319 = vld [vmem:[%s315] sm:$0xff]
        %v320 = vld [vmem:[%s315 + $0x8] sm:$0xff]
        %v321 = vld [vmem:[%s1] sm:$0xff]
        %v322 = vld [vmem:[%s1 + $0x8] sm:$0xff]
        %v323 = vld [vmem:[%s1 + $0x10] sm:$0xff]
        %v324 = vld [vmem:[%s1 + $0x18] sm:$0xff]
        %v325 = vld [vmem:[%s1 + $0x20] sm:$0xff]
        %v326 = vld [vmem:[%s1 + $0x28] sm:$0xff]
        %v327 = vld [vmem:[%s1 + $0x30] sm:$0xff]
        %v328 = vld [vmem:[%s1 + $0x38] sm:$0xff]
        %v329 = vld [vmem:[%s2] sm:$0xff]
        %v330 = vld [vmem:[%s2 + $0x8] sm:$0xff]
        %v331 = vld [vmem:[%s2 + $0x10] sm:$0xff]
        %v332 = vld [vmem:[%s2 + $0x18] sm:$0xff]
        %v333 = vld [vmem:[%s2 + $0x20] sm:$0xff]
        %v334 = vld [vmem:[%s2 + $0x28] sm:$0xff]
        %v335 = vld [vmem:[%s2 + $0x30] sm:$0xff]
        %v336 = vld [vmem:[%s2 + $0x38] sm:$0xff]
        %338 = vset.pattern.permute.xlu0 0
        %339 = vperm.xlu0 %338, %v329
        %v340 = vpop.permute.xlu0 %339
        %343 = vset.pattern.permute.xlu0 0
        %344 = vperm.xlu0 %343, %v330
        %v345 = vpop.permute.xlu0 %344
        %348 = vset.pattern.permute.xlu0 0
        %349 = vperm.xlu0 %348, %v331
        %v350 = vpop.permute.xlu0 %349
        %353 = vset.pattern.permute.xlu0 0
        %354 = vperm.xlu0 %353, %v332
        %v355 = vpop.permute.xlu0 %354
        %358 = vset.pattern.permute.xlu0 0
        %359 = vperm.xlu0 %358, %v333
        %v360 = vpop.permute.xlu0 %359
        %363 = vset.pattern.permute.xlu0 0
        %364 = vperm.xlu0 %363, %v334
        %v365 = vpop.permute.xlu0 %364
        %368 = vset.pattern.permute.xlu0 0
        %369 = vperm.xlu0 %368, %v335
        %v370 = vpop.permute.xlu0 %369
        %373 = vset.pattern.permute.xlu0 0
        %374 = vperm.xlu0 %373, %v336
        %v375 = vpop.permute.xlu0 %374
        %vm377 = vcmask 64512
        %v379 = vsel %vm377, %v321, 0
        %v382 = vsel %vm377, %v322, 0
        %v385 = vsel %vm377, %v323, 0
        %v388 = vsel %vm377, %v324, 0
        %v391 = vsel %vm377, %v325, 0
        %v394 = vsel %vm377, %v326, 0
        %v397 = vsel %vm377, %v327, 0
        %v400 = vsel %vm377, %v328, 0
        %402 = vmatprep.subr.mxu0 %v320
        %403 = vmatpush1.msra.mxu0 %v319
        %404 = vmatprep.subr.mxu0 0.0
        %405 = vmatpush1.msra.mxu0 0.0
        %406 = vmatprep.subr.mxu0 0.0
        %407 = vmatpush1.msra.mxu0 0.0
        %408 = vmatprep.subr.mxu0 0.0
        %409 = vmatpush1.msra.mxu0 0.0
        %410 = vmatprep.subr.mxu0 0.0
        %411 = vmatpush1.msra.mxu0 0.0
        %412 = vmatprep.subr.mxu0 0.0
        %413 = vmatpush1.msra.mxu0 0.0
        %414 = vmatprep.subr.mxu0 0.0
        %415 = vmatpush1.msra.mxu0 0.0
        %416 = vmatprep.subr.mxu0 0.0
        %417 = vmatpush1.msra.mxu0 0.0
        %418 = vmatprep.subr.mxu0 0.0
        %419 = vmatpush1.msra.mxu0 0.0
        %420 = vmatprep.subr.mxu0 0.0
        %421 = vmatpush1.msra.mxu0 0.0
        %422 = vmatprep.subr.mxu0 0.0
        %423 = vmatpush1.msra.mxu0 0.0
        %424 = vmatprep.subr.mxu0 0.0
        %425 = vmatpush1.msra.mxu0 0.0
        %426 = vmatprep.subr.mxu0 0.0
        %427 = vmatpush1.msra.mxu0 0.0
        %428 = vmatprep.subr.mxu0 0.0
        %429 = vmatpush1.msra.mxu0 0.0
        %430 = vmatprep.subr.mxu0 0.0
        %431 = vmatpush1.msra.mxu0 0.0
        %432 = vmatprep.subr.mxu0 0.0
        %433 = vmatpush1.msra.mxu0 0.0
        %434 = vmatprep.subr.mxu0 0.0
        %435 = vmatpush1.msra.mxu0 0.0
        %436 = vmatprep.subr.mxu0 0.0
        %437 = vmatpush1.msra.mxu0 0.0
        %438 = vmatprep.subr.mxu0 0.0
        %439 = vmatpush1.msra.mxu0 0.0
        %440 = vmatprep.subr.mxu0 0.0
        %441 = vmatpush1.msra.mxu0 0.0
        %442 = vmatprep.subr.mxu0 0.0
        %443 = vmatpush1.msra.mxu0 0.0
        %444 = vmatprep.subr.mxu0 0.0
        %445 = vmatpush1.msra.mxu0 0.0
        %446 = vmatprep.subr.mxu0 0.0
        %447 = vmatpush1.msra.mxu0 0.0
        %448 = vmatprep.subr.mxu0 0.0
        %449 = vmatpush1.msra.mxu0 0.0
        %450 = vmatprep.subr.mxu0 0.0
        %451 = vmatpush1.msra.mxu0 0.0
        %452 = vmatprep.subr.mxu0 0.0
        %453 = vmatpush1.msra.mxu0 0.0
        %454 = vmatprep.subr.mxu0 0.0
        %455 = vmatpush1.msra.mxu0 0.0
        %456 = vmatprep.subr.mxu0 0.0
        %457 = vmatpush1.msra.mxu0 0.0
        %458 = vmatprep.subr.mxu0 0.0
        %459 = vmatpush1.msra.mxu0 0.0
        %460 = vmatprep.subr.mxu0 0.0
        %461 = vmatpush1.msra.mxu0 0.0
        %462 = vmatprep.subr.mxu0 0.0
        %463 = vmatpush1.msra.mxu0 0.0
        %464 = vmatprep.subr.mxu0 0.0
        %465 = vmatpush1.msra.mxu0 0.0
        %466 = vmatprep.mubr.f32.mxu0 0.0
        %467 = vmatmul.mubr.f32.gmra.mrb[0].mxu0 %v379
        %v468 = vpop.f32.mrb[0].mxu0
        %v469 = vadd.f32 %v340, %v468
        %v470 = vpop.f32.mrb[0].mxu0
        %v471 = vadd.f32 %v340, %v470
        %472 = vmatprep.mubr.f32.mxu0 0.0
        %473 = vmatmul.mubr.f32.gmra.mrb[0].mxu0 %v382
        %v474 = vpop.f32.mrb[0].mxu0
        %v475 = vadd.f32 %v345, %v474
        %v476 = vpop.f32.mrb[0].mxu0
        %v477 = vadd.f32 %v345, %v476
        %478 = vmatprep.mubr.f32.mxu0 0.0
        %479 = vmatmul.mubr.f32.gmra.mrb[0].mxu0 %v385
        %v480 = vpop.f32.mrb[0].mxu0
        %v481 = vadd.f32 %v350, %v480
        %v482 = vpop.f32.mrb[0].mxu0
        %v483 = vadd.f32 %v350, %v482
        %484 = vmatprep.mubr.f32.mxu0 0.0
        %485 = vmatmul.mubr.f32.gmra.mrb[0].mxu0 %v388
        %v486 = vpop.f32.mrb[0].mxu0
        %v487 = vadd.f32 %v355, %v486
        %v488 = vpop.f32.mrb[0].mxu0
        %v489 = vadd.f32 %v355, %v488
        %490 = vmatprep.mubr.f32.mxu0 0.0
        %491 = vmatmul.mubr.f32.gmra.mrb[0].mxu0 %v391
        %v492 = vpop.f32.mrb[0].mxu0
        %v493 = vadd.f32 %v360, %v492
        %v494 = vpop.f32.mrb[0].mxu0
        %v495 = vadd.f32 %v360, %v494
        %496 = vmatprep.mubr.f32.mxu0 0.0
        %497 = vmatmul.mubr.f32.gmra.mrb[0].mxu0 %v394
        %v498 = vpop.f32.mrb[0].mxu0
        %v499 = vadd.f32 %v365, %v498
        %v500 = vpop.f32.mrb[0].mxu0
        %v501 = vadd.f32 %v365, %v500
        %502 = vmatprep.mubr.f32.mxu0 0.0
        %503 = vmatmul.mubr.f32.gmra.mrb[0].mxu0 %v397
        %v504 = vpop.f32.mrb[0].mxu0
        %v505 = vadd.f32 %v370, %v504
        %v506 = vpop.f32.mrb[0].mxu0
        %v507 = vadd.f32 %v370, %v506
        %508 = vmatprep.mubr.f32.mxu0 0.0
        %509 = vmatmul.mubr.f32.gmra.mrb[0].mxu0 %v400
        %v510 = vpop.f32.mrb[0].mxu0
        %v511 = vadd.f32 %v375, %v510
        %v512 = vpop.f32.mrb[0].mxu0
        %v513 = vadd.f32 %v375, %v512
        %514 = vdwg.mxu0
        %v515 = vtanh.pop %v469
        %v516 = vtanh.pop %v471
        %v517 = vtanh.pop %v475
        %v518 = vtanh.pop %v477
        %v519 = vtanh.pop %v481
        %v520 = vtanh.pop %v483
        %v521 = vtanh.pop %v487
        %v522 = vtanh.pop %v489
        %v523 = vmax.f32 %v493, 0.0
        %v524 = vmax.f32 %v495, 0.0
        %v525 = vmax.f32 %v499, 0.0
        %v526 = vmax.f32 %v501, 0.0
        %v527 = vmax.f32 %v505, 0.0
        %v528 = vmax.f32 %v507, 0.0
        %v529 = vmax.f32 %v511, 0.0
        %v530 = vmax.f32 %v513, 0.0
        %v531 = vld [vmem:[%s3] sm:$0xff]
        %v532 = vld [vmem:[%s3 + $0x8] sm:$0xff]
        %v533 = vld [vmem:[%s3 + $0x10] sm:$0xff]
        %v534 = vld [vmem:[%s3 + $0x18] sm:$0xff]
        %v535 = vld [vmem:[%s3 + $0x20] sm:$0xff]
        %v536 = vld [vmem:[%s3 + $0x28] sm:$0xff]
        %v537 = vld [vmem:[%s3 + $0x30] sm:$0xff]
        %v538 = vld [vmem:[%s3 + $0x38] sm:$0xff]
        %v539 = vld [vmem:[%s4] sm:$0xff]
        %v540 = vld [vmem:[%s4 + $0x8] sm:$0xff]
        %v541 = vld [vmem:[%s4 + $0x10] sm:$0xff]
        %v542 = vld [vmem:[%s4 + $0x18] sm:$0xff]
        %v543 = vld [vmem:[%s4 + $0x20] sm:$0xff]
        %v544 = vld [vmem:[%s4 + $0x28] sm:$0xff]
        %v545 = vld [vmem:[%s4 + $0x30] sm:$0xff]
        %v546 = vld [vmem:[%s4 + $0x38] sm:$0xff]
        %548 = vset.pattern.permute.xlu0 0
        %549 = vperm.xlu0 %548, %v539
        %v550 = vpop.permute.xlu0 %549
        %553 = vset.pattern.permute.xlu0 0
        %554 = vperm.xlu0 %553, %v540
        %v555 = vpop.permute.xlu0 %554
        %558 = vset.pattern.permute.xlu0 0
        %559 = vperm.xlu0 %558, %v541
        %v560 = vpop.permute.xlu0 %559
        %563 = vset.pattern.permute.xlu0 0
        %564 = vperm.xlu0 %563, %v542
        %v565 = vpop.permute.xlu0 %564
        %568 = vset.pattern.permute.xlu0 0
        %569 = vperm.xlu0 %568, %v543
        %v570 = vpop.permute.xlu0 %569
        %573 = vset.pattern.permute.xlu0 0
        %574 = vperm.xlu0 %573, %v544
        %v575 = vpop.permute.xlu0 %574
        %578 = vset.pattern.permute.xlu0 0
        %579 = vperm.xlu0 %578, %v545
        %v580 = vpop.permute.xlu0 %579
        %583 = vset.pattern.permute.xlu0 0
        %584 = vperm.xlu0 %583, %v546
        %v585 = vpop.permute.xlu0 %584
        %vm587 = vcmask 523264
        %v589 = vsel %vm587, %v531, 0
        %v592 = vsel %vm587, %v532, 0
        %v595 = vsel %vm587, %v533, 0
        %v598 = vsel %vm587, %v534, 0
        %v601 = vsel %vm587, %v535, 0
        %v604 = vsel %vm587, %v536, 0
        %v607 = vsel %vm587, %v537, 0
        %v610 = vsel %vm587, %v538, 0
        %612 = vmatprep.subr.mxu0 %v516
        %613 = vmatpush1.msra.mxu0 %v515
        %614 = vmatprep.subr.mxu0 %v518
        %615 = vmatpush1.msra.mxu0 %v517
        %616 = vmatprep.subr.mxu0 %v520
        %617 = vmatpush1.msra.mxu0 %v519
        %618 = vmatprep.subr.mxu0 %v522
        %619 = vmatpush1.msra.mxu0 %v521
        %620 = vmatprep.subr.mxu0 %v524
        %621 = vmatpush1.msra.mxu0 %v523
        %622 = vmatprep.subr.mxu0 %v526
        %623 = vmatpush1.msra.mxu0 %v525
        %624 = vmatprep.subr.mxu0 %v528
        %625 = vmatpush1.msra.mxu0 %v527
        %626 = vmatprep.subr.mxu0 %v530
        %627 = vmatpush1.msra.mxu0 %v529
        %628 = vmatprep.subr.mxu0 0.0
        %629 = vmatpush1.msra.mxu0 0.0
        %630 = vmatprep.subr.mxu0 0.0
        %631 = vmatpush1.msra.mxu0 0.0
        %632 = vmatprep.subr.mxu0 0.0
        %633 = vmatpush1.msra.mxu0 0.0
        %634 = vmatprep.subr.mxu0 0.0
        %635 = vmatpush1.msra.mxu0 0.0
        %636 = vmatprep.subr.mxu0 0.0
        %637 = vmatpush1.msra.mxu0 0.0
        %638 = vmatprep.subr.mxu0 0.0
        %639 = vmatpush1.msra.mxu0 0.0
        %640 = vmatprep.subr.mxu0 0.0
        %641 = vmatpush1.msra.mxu0 0.0
        %642 = vmatprep.subr.mxu0 0.0
        %643 = vmatpush1.msra.mxu0 0.0
        %644 = vmatprep.subr.mxu0 0.0
        %645 = vmatpush1.msra.mxu0 0.0
        %646 = vmatprep.subr.mxu0 0.0
        %647 = vmatpush1.msra.mxu0 0.0
        %648 = vmatprep.subr.mxu0 0.0
        %649 = vmatpush1.msra.mxu0 0.0
        %650 = vmatprep.subr.mxu0 0.0
        %651 = vmatpush1.msra.mxu0 0.0
        %652 = vmatprep.subr.mxu0 0.0
        %653 = vmatpush1.msra.mxu0 0.0
        %654 = vmatprep.subr.mxu0 0.0
        %655 = vmatpush1.msra.mxu0 0.0
        %656 = vmatprep.subr.mxu0 0.0
        %657 = vmatpush1.msra.mxu0 0.0
        %658 = vmatprep.subr.mxu0 0.0
        %659 = vmatpush1.msra.mxu0 0.0
        %660 = vmatprep.subr.mxu0 0.0
        %661 = vmatpush1.msra.mxu0 0.0
        %662 = vmatprep.subr.mxu0 0.0
        %663 = vmatpush1.msra.mxu0 0.0
        %664 = vmatprep.subr.mxu0 0.0
        %665 = vmatpush1.msra.mxu0 0.0
        %666 = vmatprep.subr.mxu0 0.0
        %667 = vmatpush1.msra.mxu0 0.0
        %668 = vmatprep.subr.mxu0 0.0
        %669 = vmatpush1.msra.mxu0 0.0
        %670 = vmatprep.subr.mxu0 0.0
        %671 = vmatpush1.msra.mxu0 0.0
        %672 = vmatprep.subr.mxu0 0.0
        %673 = vmatpush1.msra.mxu0 0.0
        %674 = vmatprep.subr.mxu0 0.0
        %675 = vmatpush1.msra.mxu0 0.0
        %676 = vmatprep.mubr.f32.mxu0 0.0
        %677 = vmatmul.mubr.f32.gmra.mrb[0].mxu0 %v589
        %v678 = vpop.f32.mrb[0].mxu0
        %v679 = vadd.f32 %v550, %v678
        %v680 = vpop.f32.mrb[0].mxu0
        %v681 = vadd.f32 %v550, %v680
        %682 = vmatprep.mubr.f32.mxu0 0.0
        %683 = vmatmul.mubr.f32.gmra.mrb[0].mxu0 %v592
        %v684 = vpop.f32.mrb[0].mxu0
        %v685 = vadd.f32 %v555, %v684
        %v686 = vpop.f32.mrb[0].mxu0
        %v687 = vadd.f32 %v555, %v686
        %688 = vmatprep.mubr.f32.mxu0 0.0
        %689 = vmatmul.mubr.f32.gmra.mrb[0].mxu0 %v595
        %v690 = vpop.f32.mrb[0].mxu0
        %v691 = vadd.f32 %v560, %v690
        %v692 = vpop.f32.mrb[0].mxu0
        %v693 = vadd.f32 %v560, %v692
        %694 = vmatprep.mubr.f32.mxu0 0.0
        %695 = vmatmul.mubr.f32.gmra.mrb[0].mxu0 %v598
        %v696 = vpop.f32.mrb[0].mxu0
        %v697 = vadd.f32 %v565, %v696
        %v698 = vpop.f32.mrb[0].mxu0
        %v699 = vadd.f32 %v565, %v698
        %700 = vmatprep.mubr.f32.mxu0 0.0
        %701 = vmatmul.mubr.f32.gmra.mrb[0].mxu0 %v601
        %v702 = vpop.f32.mrb[0].mxu0
        %v703 = vadd.f32 %v570, %v702
        %v704 = vpop.f32.mrb[0].mxu0
        %v705 = vadd.f32 %v570, %v704
        %706 = vmatprep.mubr.f32.mxu0 0.0
        %707 = vmatmul.mubr.f32.gmra.mrb[0].mxu0 %v604
        %v708 = vpop.f32.mrb[0].mxu0
        %v709 = vadd.f32 %v575, %v708
        %v710 = vpop.f32.mrb[0].mxu0
        %v711 = vadd.f32 %v575, %v710
        %712 = vmatprep.mubr.f32.mxu0 0.0
        %713 = vmatmul.mubr.f32.gmra.mrb[0].mxu0 %v607
        %v714 = vpop.f32.mrb[0].mxu0
        %v715 = vadd.f32 %v580, %v714
        %v716 = vpop.f32.mrb[0].mxu0
        %v717 = vadd.f32 %v580, %v716
        %718 = vmatprep.mubr.f32.mxu0 0.0
        %719 = vmatmul.mubr.f32.gmra.mrb[0].mxu0 %v610
        %v720 = vpop.f32.mrb[0].mxu0
        %v721 = vadd.f32 %v585, %v720
        %v722 = vpop.f32.mrb[0].mxu0
        %v723 = vadd.f32 %v585, %v722
        %724 = vdwg.mxu0
        %v725 = vtanh.pop %v679
        %v726 = vtanh.pop %v681
        %v727 = vtanh.pop %v685
        %v728 = vtanh.pop %v687
        %v729 = vtanh.pop %v691
        %v730 = vtanh.pop %v693
        %v731 = vtanh.pop %v697
        %v732 = vtanh.pop %v699
        %v733 = vmax.f32 %v703, 0.0
        %v734 = vmax.f32 %v705, 0.0
        %v735 = vmax.f32 %v709, 0.0
        %v736 = vmax.f32 %v711, 0.0
        %v737 = vmax.f32 %v715, 0.0
        %v738 = vmax.f32 %v717, 0.0
        %v739 = vmax.f32 %v721, 0.0
        %v740 = vmax.f32 %v723, 0.0
        %s741 = scalar_lea.vmem %s3, 64
        %v742 = vld [vmem:[%s741] sm:$0xff]
        %v743 = vld [vmem:[%s741 + $0x8] sm:$0xff]
        %v744 = vld [vmem:[%s741 + $0x10] sm:$0xff]
        %v745 = vld [vmem:[%s741 + $0x18] sm:$0xff]
        %v746 = vld [vmem:[%s741 + $0x20] sm:$0xff]
        %v747 = vld [vmem:[%s741 + $0x28] sm:$0xff]
        %v748 = vld [vmem:[%s741 + $0x30] sm:$0xff]
        %v749 = vld [vmem:[%s741 + $0x38] sm:$0xff]
        %s750 = scalar_lea.vmem %s4, 64
        %v751 = vld [vmem:[%s750] sm:$0xff]
        %v752 = vld [vmem:[%s750 + $0x8] sm:$0xff]
        %v753 = vld [vmem:[%s750 + $0x10] sm:$0xff]
        %v754 = vld [vmem:[%s750 + $0x18] sm:$0xff]
        %v755 = vld [vmem:[%s750 + $0x20] sm:$0xff]
        %v756 = vld [vmem:[%s750 + $0x28] sm:$0xff]
        %v757 = vld [vmem:[%s750 + $0x30] sm:$0xff]
        %v758 = vld [vmem:[%s750 + $0x38] sm:$0xff]
        %760 = vset.pattern.permute.xlu0 0
        %761 = vperm.xlu0 %760, %v751
        %v762 = vpop.permute.xlu0 %761
        %765 = vset.pattern.permute.xlu0 0
        %766 = vperm.xlu0 %765, %v752
        %v767 = vpop.permute.xlu0 %766
        %770 = vset.pattern.permute.xlu0 0
        %771 = vperm.xlu0 %770, %v753
        %v772 = vpop.permute.xlu0 %771
        %775 = vset.pattern.permute.xlu0 0
        %776 = vperm.xlu0 %775, %v754
        %v777 = vpop.permute.xlu0 %776
        %780 = vset.pattern.permute.xlu0 0
        %781 = vperm.xlu0 %780, %v755
        %v782 = vpop.permute.xlu0 %781
        %785 = vset.pattern.permute.xlu0 0
        %786 = vperm.xlu0 %785, %v756
        %v787 = vpop.permute.xlu0 %786
        %790 = vset.pattern.permute.xlu0 0
        %791 = vperm.xlu0 %790, %v757
        %v792 = vpop.permute.xlu0 %791
        %795 = vset.pattern.permute.xlu0 0
        %796 = vperm.xlu0 %795, %v758
        %v797 = vpop.permute.xlu0 %796
        %v800 = vsel %vm587, %v742, 0
        %v803 = vsel %vm587, %v743, 0
        %v806 = vsel %vm587, %v744, 0
        %v809 = vsel %vm587, %v745, 0
        %v812 = vsel %vm587, %v746, 0
        %v815 = vsel %vm587, %v747, 0
        %v818 = vsel %vm587, %v748, 0
        %v821 = vsel %vm587, %v749, 0
        %823 = vmatprep.subr.mxu0 %v726
        %824 = vmatpush1.msra.mxu0 %v725
        %825 = vmatprep.subr.mxu0 %v728
        %826 = vmatpush1.msra.mxu0 %v727
        %827 = vmatprep.subr.mxu0 %v730
        %828 = vmatpush1.msra.mxu0 %v729
        %829 = vmatprep.subr.mxu0 %v732
        %830 = vmatpush1.msra.mxu0 %v731
        %831 = vmatprep.subr.mxu0 %v734
        %832 = vmatpush1.msra.mxu0 %v733
        %833 = vmatprep.subr.mxu0 %v736
        %834 = vmatpush1.msra.mxu0 %v735
        %835 = vmatprep.subr.mxu0 %v738
        %836 = vmatpush1.msra.mxu0 %v737
        %837 = vmatprep.subr.mxu0 %v740
        %838 = vmatpush1.msra.mxu0 %v739
        %839 = vmatprep.subr.mxu0 0.0
        %840 = vmatpush1.msra.mxu0 0.0
        %841 = vmatprep.subr.mxu0 0.0
        %842 = vmatpush1.msra.mxu0 0.0
        %843 = vmatprep.subr.mxu0 0.0
        %844 = vmatpush1.msra.mxu0 0.0
        %845 = vmatprep.subr.mxu0 0.0
        %846 = vmatpush1.msra.mxu0 0.0
        %847 = vmatprep.subr.mxu0 0.0
        %848 = vmatpush1.msra.mxu0 0.0
        %849 = vmatprep.subr.mxu0 0.0
        %850 = vmatpush1.msra.mxu0 0.0
        %851 = vmatprep.subr.mxu0 0.0
        %852 = vmatpush1.msra.mxu0 0.0
        %853 = vmatprep.subr.mxu0 0.0
        %854 = vmatpush1.msra.mxu0 0.0
        %855 = vmatprep.subr.mxu0 0.0
        %856 = vmatpush1.msra.mxu0 0.0
        %857 = vmatprep.subr.mxu0 0.0
        %858 = vmatpush1.msra.mxu0 0.0
        %859 = vmatprep.subr.mxu0 0.0
        %860 = vmatpush1.msra.mxu0 0.0
        %861 = vmatprep.subr.mxu0 0.0
        %862 = vmatpush1.msra.mxu0 0.0
        %863 = vmatprep.subr.mxu0 0.0
        %864 = vmatpush1.msra.mxu0 0.0
        %865 = vmatprep.subr.mxu0 0.0
        %866 = vmatpush1.msra.mxu0 0.0
        %867 = vmatprep.subr.mxu0 0.0
        %868 = vmatpush1.msra.mxu0 0.0
        %869 = vmatprep.subr.mxu0 0.0
        %870 = vmatpush1.msra.mxu0 0.0
        %871 = vmatprep.subr.mxu0 0.0
        %872 = vmatpush1.msra.mxu0 0.0
        %873 = vmatprep.subr.mxu0 0.0
        %874 = vmatpush1.msra.mxu0 0.0
        %875 = vmatprep.subr.mxu0 0.0
        %876 = vmatpush1.msra.mxu0 0.0
        %877 = vmatprep.subr.mxu0 0.0
        %878 = vmatpush1.msra.mxu0 0.0
        %879 = vmatprep.subr.mxu0 0.0
        %880 = vmatpush1.msra.mxu0 0.0
        %881 = vmatprep.subr.mxu0 0.0
        %882 = vmatpush1.msra.mxu0 0.0
        %883 = vmatprep.subr.mxu0 0.0
        %884 = vmatpush1.msra.mxu0 0.0
        %885 = vmatprep.subr.mxu0 0.0
        %886 = vmatpush1.msra.mxu0 0.0
        %887 = vmatprep.mubr.f32.mxu0 0.0
        %888 = vmatmul.mubr.f32.gmra.mrb[0].mxu0 %v800
        %v889 = vpop.f32.mrb[0].mxu0
        %v890 = vadd.f32 %v762, %v889
        %v891 = vpop.f32.mrb[0].mxu0
        %v892 = vadd.f32 %v762, %v891
        %893 = vmatprep.mubr.f32.mxu0 0.0
        %894 = vmatmul.mubr.f32.gmra.mrb[0].mxu0 %v803
        %v895 = vpop.f32.mrb[0].mxu0
        %v896 = vadd.f32 %v767, %v895
        %v897 = vpop.f32.mrb[0].mxu0
        %v898 = vadd.f32 %v767, %v897
        %899 = vmatprep.mubr.f32.mxu0 0.0
        %900 = vmatmul.mubr.f32.gmra.mrb[0].mxu0 %v806
        %v901 = vpop.f32.mrb[0].mxu0
        %v902 = vadd.f32 %v772, %v901
        %v903 = vpop.f32.mrb[0].mxu0
        %v904 = vadd.f32 %v772, %v903
        %905 = vmatprep.mubr.f32.mxu0 0.0
        %906 = vmatmul.mubr.f32.gmra.mrb[0].mxu0 %v809
        %v907 = vpop.f32.mrb[0].mxu0
        %v908 = vadd.f32 %v777, %v907
        %v909 = vpop.f32.mrb[0].mxu0
        %v910 = vadd.f32 %v777, %v909
        %911 = vmatprep.mubr.f32.mxu0 0.0
        %912 = vmatmul.mubr.f32.gmra.mrb[0].mxu0 %v812
        %v913 = vpop.f32.mrb[0].mxu0
        %v914 = vadd.f32 %v782, %v913
        %v915 = vpop.f32.mrb[0].mxu0
        %v916 = vadd.f32 %v782, %v915
        %917 = vmatprep.mubr.f32.mxu0 0.0
        %918 = vmatmul.mubr.f32.gmra.mrb[0].mxu0 %v815
        %v919 = vpop.f32.mrb[0].mxu0
        %v920 = vadd.f32 %v787, %v919
        %v921 = vpop.f32.mrb[0].mxu0
        %v922 = vadd.f32 %v787, %v921
        %923 = vmatprep.mubr.f32.mxu0 0.0
        %924 = vmatmul.mubr.f32.gmra.mrb[0].mxu0 %v818
        %v925 = vpop.f32.mrb[0].mxu0
        %v926 = vadd.f32 %v792, %v925
        %v927 = vpop.f32.mrb[0].mxu0
        %v928 = vadd.f32 %v792, %v927
        %929 = vmatprep.mubr.f32.mxu0 0.0
        %930 = vmatmul.mubr.f32.gmra.mrb[0].mxu0 %v821
        %v931 = vpop.f32.mrb[0].mxu0
        %v932 = vadd.f32 %v797, %v931
        %v933 = vpop.f32.mrb[0].mxu0
        %v934 = vadd.f32 %v797, %v933
        %935 = vdwg.mxu0
        %v936 = vld [vmem:[%s5] sm:$0xff]
        %v937 = vld [vmem:[%s5 + $0x8] sm:$0xff]
        %v938 = vld [vmem:[%s6] sm:$0xff]
        %v939 = vld [vmem:[%s6 + $0x8] sm:$0xff]
        %941 = vset.pattern.permute.xlu0 0
        %942 = vperm.xlu0 %941, %v938
        %v943 = vpop.permute.xlu0 %942
        %946 = vset.pattern.permute.xlu0 0
        %947 = vperm.xlu0 %946, %v939
        %v948 = vpop.permute.xlu0 %947
        %v951 = vsel %vm587, %v936, 0
        %v954 = vsel %vm587, %v937, 0
        %956 = vmatprep.subr.mxu0 %v892
        %957 = vmatpush1.msra.mxu0 %v890
        %958 = vmatprep.subr.mxu0 %v898
        %959 = vmatpush1.msra.mxu0 %v896
        %960 = vmatprep.subr.mxu0 %v904
        %961 = vmatpush1.msra.mxu0 %v902
        %962 = vmatprep.subr.mxu0 %v910
        %963 = vmatpush1.msra.mxu0 %v908
        %964 = vmatprep.subr.mxu0 %v916
        %965 = vmatpush1.msra.mxu0 %v914
        %966 = vmatprep.subr.mxu0 %v922
        %967 = vmatpush1.msra.mxu0 %v920
        %968 = vmatprep.subr.mxu0 %v928
        %969 = vmatpush1.msra.mxu0 %v926
        %970 = vmatprep.subr.mxu0 %v934
        %971 = vmatpush1.msra.mxu0 %v932
        %972 = vmatprep.subr.mxu0 0.0
        %973 = vmatpush1.msra.mxu0 0.0
        %974 = vmatprep.subr.mxu0 0.0
        %975 = vmatpush1.msra.mxu0 0.0
        %976 = vmatprep.subr.mxu0 0.0
        %977 = vmatpush1.msra.mxu0 0.0
        %978 = vmatprep.subr.mxu0 0.0
        %979 = vmatpush1.msra.mxu0 0.0
        %980 = vmatprep.subr.mxu0 0.0
        %981 = vmatpush1.msra.mxu0 0.0
        %982 = vmatprep.subr.mxu0 0.0
        %983 = vmatpush1.msra.mxu0 0.0
        %984 = vmatprep.subr.mxu0 0.0
        %985 = vmatpush1.msra.mxu0 0.0
        %986 = vmatprep.subr.mxu0 0.0
        %987 = vmatpush1.msra.mxu0 0.0
        %988 = vmatprep.subr.mxu0 0.0
        %989 = vmatpush1.msra.mxu0 0.0
        %990 = vmatprep.subr.mxu0 0.0
        %991 = vmatpush1.msra.mxu0 0.0
        %992 = vmatprep.subr.mxu0 0.0
        %993 = vmatpush1.msra.mxu0 0.0
        %994 = vmatprep.subr.mxu0 0.0
        %995 = vmatpush1.msra.mxu0 0.0
        %996 = vmatprep.subr.mxu0 0.0
        %997 = vmatpush1.msra.mxu0 0.0
        %998 = vmatprep.subr.mxu0 0.0
        %999 = vmatpush1.msra.mxu0 0.0
        %1000 = vmatprep.subr.mxu0 0.0
        %1001 = vmatpush1.msra.mxu0 0.0
        %1002 = vmatprep.subr.mxu0 0.0
        %1003 = vmatpush1.msra.mxu0 0.0
        %1004 = vmatprep.subr.mxu0 0.0
        %1005 = vmatpush1.msra.mxu0 0.0
        %1006 = vmatprep.subr.mxu0 0.0
        %1007 = vmatpush1.msra.mxu0 0.0
        %1008 = vmatprep.subr.mxu0 0.0
        %1009 = vmatpush1.msra.mxu0 0.0
        %1010 = vmatprep.subr.mxu0 0.0
        %1011 = vmatpush1.msra.mxu0 0.0
        %1012 = vmatprep.subr.mxu0 0.0
        %1013 = vmatpush1.msra.mxu0 0.0
        %1014 = vmatprep.subr.mxu0 0.0
        %1015 = vmatpush1.msra.mxu0 0.0
        %1016 = vmatprep.subr.mxu0 0.0
        %1017 = vmatpush1.msra.mxu0 0.0
        %1018 = vmatprep.subr.mxu0 0.0
        %1019 = vmatpush1.msra.mxu0 0.0
        %1020 = vmatprep.mubr.f32.mxu0 0.0
        %1021 = vmatmul.mubr.f32.gmra.mrb[0].mxu0 %v951
        %v1022 = vpop.f32.mrb[0].mxu0
        %v1023 = vadd.f32 %v943, %v1022
        %v1024 = vpop.f32.mrb[0].mxu0
        %v1025 = vadd.f32 %v943, %v1024
        %1026 = vmatprep.mubr.f32.mxu0 0.0
        %1027 = vmatmul.mubr.f32.gmra.mrb[0].mxu0 %v954
        %v1028 = vpop.f32.mrb[0].mxu0
        %v1029 = vadd.f32 %v948, %v1028
        %v1030 = vpop.f32.mrb[0].mxu0
        %v1031 = vadd.f32 %v948, %v1030
        %1032 = vdwg.mxu0
        %v1033 = vsub.f32 0.0, %v1023
        %v1034 = vsub.f32 0.0, %v1025
        %v1035 = vmul.f32 %v1033, 1.442695
        %v1036 = vpow.pop %v1035
        %v1037 = vmul.f32 %v1034, 1.442695
        %v1038 = vpow.pop %v1037
        %v1039 = vsub.f32 %v319, %v1029
        %v1040 = vsub.f32 %v320, %v1031
        %v1041 = vmul.f32 %v1036, %v1039
        %v1042 = vmul.f32 %v1038, %v1040
        %s1043 = scalar_lea.vmem %s1, 64
        %v1044 = vld [vmem:[%s1043] sm:$0xff]
        %v1045 = vld [vmem:[%s1043 + $0x8] sm:$0xff]
        %v1046 = vld [vmem:[%s1043 + $0x10] sm:$0xff]
        %v1047 = vld [vmem:[%s1043 + $0x18] sm:$0xff]
        %v1048 = vld [vmem:[%s1043 + $0x20] sm:$0xff]
        %v1049 = vld [vmem:[%s1043 + $0x28] sm:$0xff]
        %v1050 = vld [vmem:[%s1043 + $0x30] sm:$0xff]
        %v1051 = vld [vmem:[%s1043 + $0x38] sm:$0xff]
        %s1052 = scalar_lea.vmem %s2, 64
        %v1053 = vld [vmem:[%s1052] sm:$0xff]
        %v1054 = vld [vmem:[%s1052 + $0x8] sm:$0xff]
        %v1055 = vld [vmem:[%s1052 + $0x10] sm:$0xff]
        %v1056 = vld [vmem:[%s1052 + $0x18] sm:$0xff]
        %v1057 = vld [vmem:[%s1052 + $0x20] sm:$0xff]
        %v1058 = vld [vmem:[%s1052 + $0x28] sm:$0xff]
        %v1059 = vld [vmem:[%s1052 + $0x30] sm:$0xff]
        %v1060 = vld [vmem:[%s1052 + $0x38] sm:$0xff]
        %1062 = vset.pattern.permute.xlu0 0
        %1063 = vperm.xlu0 %1062, %v1053
        %v1064 = vpop.permute.xlu0 %1063
        %1067 = vset.pattern.permute.xlu0 0
        %1068 = vperm.xlu0 %1067, %v1054
        %v1069 = vpop.permute.xlu0 %1068
        %1072 = vset.pattern.permute.xlu0 0
        %1073 = vperm.xlu0 %1072, %v1055
        %v1074 = vpop.permute.xlu0 %1073
        %1077 = vset.pattern.permute.xlu0 0
        %1078 = vperm.xlu0 %1077, %v1056
        %v1079 = vpop.permute.xlu0 %1078
        %1082 = vset.pattern.permute.xlu0 0
        %1083 = vperm.xlu0 %1082, %v1057
        %v1084 = vpop.permute.xlu0 %1083
        %1087 = vset.pattern.permute.xlu0 0
        %1088 = vperm.xlu0 %1087, %v1058
        %v1089 = vpop.permute.xlu0 %1088
        %1092 = vset.pattern.permute.xlu0 0
        %1093 = vperm.xlu0 %1092, %v1059
        %v1094 = vpop.permute.xlu0 %1093
        %1097 = vset.pattern.permute.xlu0 0
        %1098 = vperm.xlu0 %1097, %v1060
        %v1099 = vpop.permute.xlu0 %1098
        %v1102 = vsel %vm377, %v1044, 0
        %v1105 = vsel %vm377, %v1045, 0
        %v1108 = vsel %vm377, %v1046, 0
        %v1111 = vsel %vm377, %v1047, 0
        %v1114 = vsel %vm377, %v1048, 0
        %v1117 = vsel %vm377, %v1049, 0
        %v1120 = vsel %vm377, %v1050, 0
        %v1123 = vsel %vm377, %v1051, 0
        %1125 = vmatprep.subr.mxu0 %v1042
        %1126 = vmatpush1.msra.mxu0 %v1041
        %1127 = vmatprep.subr.mxu0 0.0
        %1128 = vmatpush1.msra.mxu0 0.0
        %1129 = vmatprep.subr.mxu0 0.0
        %1130 = vmatpush1.msra.mxu0 0.0
        %1131 = vmatprep.subr.mxu0 0.0
        %1132 = vmatpush1.msra.mxu0 0.0
        %1133 = vmatprep.subr.mxu0 0.0
        %1134 = vmatpush1.msra.mxu0 0.0
        %1135 = vmatprep.subr.mxu0 0.0
        %1136 = vmatpush1.msra.mxu0 0.0
        %1137 = vmatprep.subr.mxu0 0.0
        %1138 = vmatpush1.msra.mxu0 0.0
        %1139 = vmatprep.subr.mxu0 0.0
        %1140 = vmatpush1.msra.mxu0 0.0
        %1141 = vmatprep.subr.mxu0 0.0
        %1142 = vmatpush1.msra.mxu0 0.0
        %1143 = vmatprep.subr.mxu0 0.0
        %1144 = vmatpush1.msra.mxu0 0.0
        %1145 = vmatprep.subr.mxu0 0.0
        %1146 = vmatpush1.msra.mxu0 0.0
        %1147 = vmatprep.subr.mxu0 0.0
        %1148 = vmatpush1.msra.mxu0 0.0
        %1149 = vmatprep.subr.mxu0 0.0
        %1150 = vmatpush1.msra.mxu0 0.0
        %1151 = vmatprep.subr.mxu0 0.0
        %1152 = vmatpush1.msra.mxu0 0.0
        %1153 = vmatprep.subr.mxu0 0.0
        %1154 = vmatpush1.msra.mxu0 0.0
        %1155 = vmatprep.subr.mxu0 0.0
        %1156 = vmatpush1.msra.mxu0 0.0
        %1157 = vmatprep.subr.mxu0 0.0
        %1158 = vmatpush1.msra.mxu0 0.0
        %1159 = vmatprep.subr.mxu0 0.0
        %1160 = vmatpush1.msra.mxu0 0.0
        %1161 = vmatprep.subr.mxu0 0.0
        %1162 = vmatpush1.msra.mxu0 0.0
        %1163 = vmatprep.subr.mxu0 0.0
        %1164 = vmatpush1.msra.mxu0 0.0
        %1165 = vmatprep.subr.mxu0 0.0
        %1166 = vmatpush1.msra.mxu0 0.0
        %1167 = vmatprep.subr.mxu0 0.0
        %1168 = vmatpush1.msra.mxu0 0.0
        %1169 = vmatprep.subr.mxu0 0.0
        %1170 = vmatpush1.msra.mxu0 0.0
        %1171 = vmatprep.subr.mxu0 0.0
        %1172 = vmatpush1.msra.mxu0 0.0
        %1173 = vmatprep.subr.mxu0 0.0
        %1174 = vmatpush1.msra.mxu0 0.0
        %1175 = vmatprep.subr.mxu0 0.0
        %1176 = vmatpush1.msra.mxu0 0.0
        %1177 = vmatprep.subr.mxu0 0.0
        %1178 = vmatpush1.msra.mxu0 0.0
        %1179 = vmatprep.subr.mxu0 0.0
        %1180 = vmatpush1.msra.mxu0 0.0
        %1181 = vmatprep.subr.mxu0 0.0
        %1182 = vmatpush1.msra.mxu0 0.0
        %1183 = vmatprep.subr.mxu0 0.0
        %1184 = vmatpush1.msra.mxu0 0.0
        %1185 = vmatprep.subr.mxu0 0.0
        %1186 = vmatpush1.msra.mxu0 0.0
        %1187 = vmatprep.subr.mxu0 0.0
        %1188 = vmatpush1.msra.mxu0 0.0
        %1189 = vmatprep.mubr.f32.mxu0 0.0
        %1190 = vmatmul.mubr.f32.gmra.mrb[0].mxu0 %v1102
        %v1191 = vpop.f32.mrb[0].mxu0
        %v1192 = vadd.f32 %v1064, %v1191
        %v1193 = vpop.f32.mrb[0].mxu0
        %v1194 = vadd.f32 %v1064, %v1193
        %1195 = vmatprep.mubr.f32.mxu0 0.0
        %1196 = vmatmul.mubr.f32.gmra.mrb[0].mxu0 %v1105
        %v1197 = vpop.f32.mrb[0].mxu0
        %v1198 = vadd.f32 %v1069, %v1197
        %v1199 = vpop.f32.mrb[0].mxu0
        %v1200 = vadd.f32 %v1069, %v1199
        %1201 = vmatprep.mubr.f32.mxu0 0.0
        %1202 = vmatmul.mubr.f32.gmra.mrb[0].mxu0 %v1108
        %v1203 = vpop.f32.mrb[0].mxu0
        %v1204 = vadd.f32 %v1074, %v1203
        %v1205 = vpop.f32.mrb[0].mxu0
        %v1206 = vadd.f32 %v1074, %v1205
        %1207 = vmatprep.mubr.f32.mxu0 0.0
        %1208 = vmatmul.mubr.f32.gmra.mrb[0].mxu0 %v1111
        %v1209 = vpop.f32.mrb[0].mxu0
        %v1210 = vadd.f32 %v1079, %v1209
        %v1211 = vpop.f32.mrb[0].mxu0
        %v1212 = vadd.f32 %v1079, %v1211
        %1213 = vmatprep.mubr.f32.mxu0 0.0
        %1214 = vmatmul.mubr.f32.gmra.mrb[0].mxu0 %v1114
        %v1215 = vpop.f32.mrb[0].mxu0
        %v1216 = vadd.f32 %v1084, %v1215
        %v1217 = vpop.f32.mrb[0].mxu0
        %v1218 = vadd.f32 %v1084, %v1217
        %1219 = vmatprep.mubr.f32.mxu0 0.0
        %1220 = vmatmul.mubr.f32.gmra.mrb[0].mxu0 %v1117
        %v1221 = vpop.f32.mrb[0].mxu0
        %v1222 = vadd.f32 %v1089, %v1221
        %v1223 = vpop.f32.mrb[0].mxu0
        %v1224 = vadd.f32 %v1089, %v1223
        %1225 = vmatprep.mubr.f32.mxu0 0.0
        %1226 = vmatmul.mubr.f32.gmra.mrb[0].mxu0 %v1120
        %v1227 = vpop.f32.mrb[0].mxu0
        %v1228 = vadd.f32 %v1094, %v1227
        %v1229 = vpop.f32.mrb[0].mxu0
        %v1230 = vadd.f32 %v1094, %v1229
        %1231 = vmatprep.mubr.f32.mxu0 0.0
        %1232 = vmatmul.mubr.f32.gmra.mrb[0].mxu0 %v1123
        %v1233 = vpop.f32.mrb[0].mxu0
        %v1234 = vadd.f32 %v1099, %v1233
        %v1235 = vpop.f32.mrb[0].mxu0
        %v1236 = vadd.f32 %v1099, %v1235
        %1237 = vdwg.mxu0
        %v1238 = vtanh.pop %v1192
        %v1239 = vtanh.pop %v1194
        %v1240 = vtanh.pop %v1198
        %v1241 = vtanh.pop %v1200
        %v1242 = vtanh.pop %v1204
        %v1243 = vtanh.pop %v1206
        %v1244 = vtanh.pop %v1210
        %v1245 = vtanh.pop %v1212
        %v1246 = vmax.f32 %v1216, 0.0
        %v1247 = vmax.f32 %v1218, 0.0
        %v1248 = vmax.f32 %v1222, 0.0
        %v1249 = vmax.f32 %v1224, 0.0
        %v1250 = vmax.f32 %v1228, 0.0
        %v1251 = vmax.f32 %v1230, 0.0
        %v1252 = vmax.f32 %v1234, 0.0
        %v1253 = vmax.f32 %v1236, 0.0
        %s1254 = scalar_lea.vmem %s3, 128
        %v1255 = vld [vmem:[%s1254] sm:$0xff]
        %v1256 = vld [vmem:[%s1254 + $0x8] sm:$0xff]
        %v1257 = vld [vmem:[%s1254 + $0x10] sm:$0xff]
        %v1258 = vld [vmem:[%s1254 + $0x18] sm:$0xff]
        %v1259 = vld [vmem:[%s1254 + $0x20] sm:$0xff]
        %v1260 = vld [vmem:[%s1254 + $0x28] sm:$0xff]
        %v1261 = vld [vmem:[%s1254 + $0x30] sm:$0xff]
        %v1262 = vld [vmem:[%s1254 + $0x38] sm:$0xff]
        %s1263 = scalar_lea.vmem %s4, 128
        %v1264 = vld [vmem:[%s1263] sm:$0xff]
        %v1265 = vld [vmem:[%s1263 + $0x8] sm:$0xff]
        %v1266 = vld [vmem:[%s1263 + $0x10] sm:$0xff]
        %v1267 = vld [vmem:[%s1263 + $0x18] sm:$0xff]
        %v1268 = vld [vmem:[%s1263 + $0x20] sm:$0xff]
        %v1269 = vld [vmem:[%s1263 + $0x28] sm:$0xff]
        %v1270 = vld [vmem:[%s1263 + $0x30] sm:$0xff]
        %v1271 = vld [vmem:[%s1263 + $0x38] sm:$0xff]
        %1273 = vset.pattern.permute.xlu0 0
        %1274 = vperm.xlu0 %1273, %v1264
        %v1275 = vpop.permute.xlu0 %1274
        %1278 = vset.pattern.permute.xlu0 0
        %1279 = vperm.xlu0 %1278, %v1265
        %v1280 = vpop.permute.xlu0 %1279
        %1283 = vset.pattern.permute.xlu0 0
        %1284 = vperm.xlu0 %1283, %v1266
        %v1285 = vpop.permute.xlu0 %1284
        %1288 = vset.pattern.permute.xlu0 0
        %1289 = vperm.xlu0 %1288, %v1267
        %v1290 = vpop.permute.xlu0 %1289
        %1293 = vset.pattern.permute.xlu0 0
        %1294 = vperm.xlu0 %1293, %v1268
        %v1295 = vpop.permute.xlu0 %1294
        %1298 = vset.pattern.permute.xlu0 0
        %1299 = vperm.xlu0 %1298, %v1269
        %v1300 = vpop.permute.xlu0 %1299
        %1303 = vset.pattern.permute.xlu0 0
        %1304 = vperm.xlu0 %1303, %v1270
        %v1305 = vpop.permute.xlu0 %1304
        %1308 = vset.pattern.permute.xlu0 0
        %1309 = vperm.xlu0 %1308, %v1271
        %v1310 = vpop.permute.xlu0 %1309
        %v1313 = vsel %vm587, %v1255, 0
        %v1316 = vsel %vm587, %v1256, 0
        %v1319 = vsel %vm587, %v1257, 0
        %v1322 = vsel %vm587, %v1258, 0
        %v1325 = vsel %vm587, %v1259, 0
        %v1328 = vsel %vm587, %v1260, 0
        %v1331 = vsel %vm587, %v1261, 0
        %v1334 = vsel %vm587, %v1262, 0
        %1336 = vmatprep.subr.mxu0 %v1239
        %1337 = vmatpush1.msra.mxu0 %v1238
        %1338 = vmatprep.subr.mxu0 %v1241
        %1339 = vmatpush1.msra.mxu0 %v1240
        %1340 = vmatprep.subr.mxu0 %v1243
        %1341 = vmatpush1.msra.mxu0 %v1242
        %1342 = vmatprep.subr.mxu0 %v1245
        %1343 = vmatpush1.msra.mxu0 %v1244
        %1344 = vmatprep.subr.mxu0 %v1247
        %1345 = vmatpush1.msra.mxu0 %v1246
        %1346 = vmatprep.subr.mxu0 %v1249
        %1347 = vmatpush1.msra.mxu0 %v1248
        %1348 = vmatprep.subr.mxu0 %v1251
        %1349 = vmatpush1.msra.mxu0 %v1250
        %1350 = vmatprep.subr.mxu0 %v1253
        %1351 = vmatpush1.msra.mxu0 %v1252
        %1352 = vmatprep.subr.mxu0 0.0
        %1353 = vmatpush1.msra.mxu0 0.0
        %1354 = vmatprep.subr.mxu0 0.0
        %1355 = vmatpush1.msra.mxu0 0.0
        %1356 = vmatprep.subr.mxu0 0.0
        %1357 = vmatpush1.msra.mxu0 0.0
        %1358 = vmatprep.subr.mxu0 0.0
        %1359 = vmatpush1.msra.mxu0 0.0
        %1360 = vmatprep.subr.mxu0 0.0
        %1361 = vmatpush1.msra.mxu0 0.0
        %1362 = vmatprep.subr.mxu0 0.0
        %1363 = vmatpush1.msra.mxu0 0.0
        %1364 = vmatprep.subr.mxu0 0.0
        %1365 = vmatpush1.msra.mxu0 0.0
        %1366 = vmatprep.subr.mxu0 0.0
        %1367 = vmatpush1.msra.mxu0 0.0
        %1368 = vmatprep.subr.mxu0 0.0
        %1369 = vmatpush1.msra.mxu0 0.0
        %1370 = vmatprep.subr.mxu0 0.0
        %1371 = vmatpush1.msra.mxu0 0.0
        %1372 = vmatprep.subr.mxu0 0.0
        %1373 = vmatpush1.msra.mxu0 0.0
        %1374 = vmatprep.subr.mxu0 0.0
        %1375 = vmatpush1.msra.mxu0 0.0
        %1376 = vmatprep.subr.mxu0 0.0
        %1377 = vmatpush1.msra.mxu0 0.0
        %1378 = vmatprep.subr.mxu0 0.0
        %1379 = vmatpush1.msra.mxu0 0.0
        %1380 = vmatprep.subr.mxu0 0.0
        %1381 = vmatpush1.msra.mxu0 0.0
        %1382 = vmatprep.subr.mxu0 0.0
        %1383 = vmatpush1.msra.mxu0 0.0
        %1384 = vmatprep.subr.mxu0 0.0
        %1385 = vmatpush1.msra.mxu0 0.0
        %1386 = vmatprep.subr.mxu0 0.0
        %1387 = vmatpush1.msra.mxu0 0.0
        %1388 = vmatprep.subr.mxu0 0.0
        %1389 = vmatpush1.msra.mxu0 0.0
        %1390 = vmatprep.subr.mxu0 0.0
        %1391 = vmatpush1.msra.mxu0 0.0
        %1392 = vmatprep.subr.mxu0 0.0
        %1393 = vmatpush1.msra.mxu0 0.0
        %1394 = vmatprep.subr.mxu0 0.0
        %1395 = vmatpush1.msra.mxu0 0.0
        %1396 = vmatprep.subr.mxu0 0.0
        %1397 = vmatpush1.msra.mxu0 0.0
        %1398 = vmatprep.subr.mxu0 0.0
        %1399 = vmatpush1.msra.mxu0 0.0
        %1400 = vmatprep.mubr.f32.mxu0 0.0
        %1401 = vmatmul.mubr.f32.gmra.mrb[0].mxu0 %v1313
        %v1402 = vpop.f32.mrb[0].mxu0
        %v1403 = vadd.f32 %v1275, %v1402
        %v1404 = vpop.f32.mrb[0].mxu0
        %v1405 = vadd.f32 %v1275, %v1404
        %1406 = vmatprep.mubr.f32.mxu0 0.0
        %1407 = vmatmul.mubr.f32.gmra.mrb[0].mxu0 %v1316
        %v1408 = vpop.f32.mrb[0].mxu0
        %v1409 = vadd.f32 %v1280, %v1408
        %v1410 = vpop.f32.mrb[0].mxu0
        %v1411 = vadd.f32 %v1280, %v1410
        %1412 = vmatprep.mubr.f32.mxu0 0.0
        %1413 = vmatmul.mubr.f32.gmra.mrb[0].mxu0 %v1319
        %v1414 = vpop.f32.mrb[0].mxu0
        %v1415 = vadd.f32 %v1285, %v1414
        %v1416 = vpop.f32.mrb[0].mxu0
        %v1417 = vadd.f32 %v1285, %v1416
        %1418 = vmatprep.mubr.f32.mxu0 0.0
        %1419 = vmatmul.mubr.f32.gmra.mrb[0].mxu0 %v1322
        %v1420 = vpop.f32.mrb[0].mxu0
        %v1421 = vadd.f32 %v1290, %v1420
        %v1422 = vpop.f32.mrb[0].mxu0
        %v1423 = vadd.f32 %v1290, %v1422
        %1424 = vmatprep.mubr.f32.mxu0 0.0
        %1425 = vmatmul.mubr.f32.gmra.mrb[0].mxu0 %v1325
        %v1426 = vpop.f32.mrb[0].mxu0
        %v1427 = vadd.f32 %v1295, %v1426
        %v1428 = vpop.f32.mrb[0].mxu0
        %v1429 = vadd.f32 %v1295, %v1428
        %1430 = vmatprep.mubr.f32.mxu0 0.0
        %1431 = vmatmul.mubr.f32.gmra.mrb[0].mxu0 %v1328
        %v1432 = vpop.f32.mrb[0].mxu0
        %v1433 = vadd.f32 %v1300, %v1432
        %v1434 = vpop.f32.mrb[0].mxu0
        %v1435 = vadd.f32 %v1300, %v1434
        %1436 = vmatprep.mubr.f32.mxu0 0.0
        %1437 = vmatmul.mubr.f32.gmra.mrb[0].mxu0 %v1331
        %v1438 = vpop.f32.mrb[0].mxu0
        %v1439 = vadd.f32 %v1305, %v1438
        %v1440 = vpop.f32.mrb[0].mxu0
        %v1441 = vadd.f32 %v1305, %v1440
        %1442 = vmatprep.mubr.f32.mxu0 0.0
        %1443 = vmatmul.mubr.f32.gmra.mrb[0].mxu0 %v1334
        %v1444 = vpop.f32.mrb[0].mxu0
        %v1445 = vadd.f32 %v1310, %v1444
        %v1446 = vpop.f32.mrb[0].mxu0
        %v1447 = vadd.f32 %v1310, %v1446
        %1448 = vdwg.mxu0
        %v1449 = vtanh.pop %v1403
        %v1450 = vtanh.pop %v1405
        %v1451 = vtanh.pop %v1409
        %v1452 = vtanh.pop %v1411
        %v1453 = vtanh.pop %v1415
        %v1454 = vtanh.pop %v1417
        %v1455 = vtanh.pop %v1421
        %v1456 = vtanh.pop %v1423
        %v1457 = vmax.f32 %v1427, 0.0
        %v1458 = vmax.f32 %v1429, 0.0
        %v1459 = vmax.f32 %v1433, 0.0
        %v1460 = vmax.f32 %v1435, 0.0
        %v1461 = vmax.f32 %v1439, 0.0
        %v1462 = vmax.f32 %v1441, 0.0
        %v1463 = vmax.f32 %v1445, 0.0
        %v1464 = vmax.f32 %v1447, 0.0
        %s1465 = scalar_lea.vmem %s3, 192
        %v1466 = vld [vmem:[%s1465] sm:$0xff]
        %v1467 = vld [vmem:[%s1465 + $0x8] sm:$0xff]
        %v1468 = vld [vmem:[%s1465 + $0x10] sm:$0xff]
        %v1469 = vld [vmem:[%s1465 + $0x18] sm:$0xff]
        %v1470 = vld [vmem:[%s1465 + $0x20] sm:$0xff]
        %v1471 = vld [vmem:[%s1465 + $0x28] sm:$0xff]
        %v1472 = vld [vmem:[%s1465 + $0x30] sm:$0xff]
        %v1473 = vld [vmem:[%s1465 + $0x38] sm:$0xff]
        %s1474 = scalar_lea.vmem %s4, 192
        %v1475 = vld [vmem:[%s1474] sm:$0xff]
        %v1476 = vld [vmem:[%s1474 + $0x8] sm:$0xff]
        %v1477 = vld [vmem:[%s1474 + $0x10] sm:$0xff]
        %v1478 = vld [vmem:[%s1474 + $0x18] sm:$0xff]
        %v1479 = vld [vmem:[%s1474 + $0x20] sm:$0xff]
        %v1480 = vld [vmem:[%s1474 + $0x28] sm:$0xff]
        %v1481 = vld [vmem:[%s1474 + $0x30] sm:$0xff]
        %v1482 = vld [vmem:[%s1474 + $0x38] sm:$0xff]
        %1484 = vset.pattern.permute.xlu0 0
        %1485 = vperm.xlu0 %1484, %v1475
        %v1486 = vpop.permute.xlu0 %1485
        %1489 = vset.pattern.permute.xlu0 0
        %1490 = vperm.xlu0 %1489, %v1476
        %v1491 = vpop.permute.xlu0 %1490
        %1494 = vset.pattern.permute.xlu0 0
        %1495 = vperm.xlu0 %1494, %v1477
        %v1496 = vpop.permute.xlu0 %1495
        %1499 = vset.pattern.permute.xlu0 0
        %1500 = vperm.xlu0 %1499, %v1478
        %v1501 = vpop.permute.xlu0 %1500
        %1504 = vset.pattern.permute.xlu0 0
        %1505 = vperm.xlu0 %1504, %v1479
        %v1506 = vpop.permute.xlu0 %1505
        %1509 = vset.pattern.permute.xlu0 0
        %1510 = vperm.xlu0 %1509, %v1480
        %v1511 = vpop.permute.xlu0 %1510
        %1514 = vset.pattern.permute.xlu0 0
        %1515 = vperm.xlu0 %1514, %v1481
        %v1516 = vpop.permute.xlu0 %1515
        %1519 = vset.pattern.permute.xlu0 0
        %1520 = vperm.xlu0 %1519, %v1482
        %v1521 = vpop.permute.xlu0 %1520
        %v1524 = vsel %vm587, %v1466, 0
        %v1527 = vsel %vm587, %v1467, 0
        %v1530 = vsel %vm587, %v1468, 0
        %v1533 = vsel %vm587, %v1469, 0
        %v1536 = vsel %vm587, %v1470, 0
        %v1539 = vsel %vm587, %v1471, 0
        %v1542 = vsel %vm587, %v1472, 0
        %v1545 = vsel %vm587, %v1473, 0
        %1547 = vmatprep.subr.mxu0 %v1450
        %1548 = vmatpush1.msra.mxu0 %v1449
        %1549 = vmatprep.subr.mxu0 %v1452
        %1550 = vmatpush1.msra.mxu0 %v1451
        %1551 = vmatprep.subr.mxu0 %v1454
        %1552 = vmatpush1.msra.mxu0 %v1453
        %1553 = vmatprep.subr.mxu0 %v1456
        %1554 = vmatpush1.msra.mxu0 %v1455
        %1555 = vmatprep.subr.mxu0 %v1458
        %1556 = vmatpush1.msra.mxu0 %v1457
        %1557 = vmatprep.subr.mxu0 %v1460
        %1558 = vmatpush1.msra.mxu0 %v1459
        %1559 = vmatprep.subr.mxu0 %v1462
        %1560 = vmatpush1.msra.mxu0 %v1461
        %1561 = vmatprep.subr.mxu0 %v1464
        %1562 = vmatpush1.msra.mxu0 %v1463
        %1563 = vmatprep.subr.mxu0 0.0
        %1564 = vmatpush1.msra.mxu0 0.0
        %1565 = vmatprep.subr.mxu0 0.0
        %1566 = vmatpush1.msra.mxu0 0.0
        %1567 = vmatprep.subr.mxu0 0.0
        %1568 = vmatpush1.msra.mxu0 0.0
        %1569 = vmatprep.subr.mxu0 0.0
        %1570 = vmatpush1.msra.mxu0 0.0
        %1571 = vmatprep.subr.mxu0 0.0
        %1572 = vmatpush1.msra.mxu0 0.0
        %1573 = vmatprep.subr.mxu0 0.0
        %1574 = vmatpush1.msra.mxu0 0.0
        %1575 = vmatprep.subr.mxu0 0.0
        %1576 = vmatpush1.msra.mxu0 0.0
        %1577 = vmatprep.subr.mxu0 0.0
        %1578 = vmatpush1.msra.mxu0 0.0
        %1579 = vmatprep.subr.mxu0 0.0
        %1580 = vmatpush1.msra.mxu0 0.0
        %1581 = vmatprep.subr.mxu0 0.0
        %1582 = vmatpush1.msra.mxu0 0.0
        %1583 = vmatprep.subr.mxu0 0.0
        %1584 = vmatpush1.msra.mxu0 0.0
        %1585 = vmatprep.subr.mxu0 0.0
        %1586 = vmatpush1.msra.mxu0 0.0
        %1587 = vmatprep.subr.mxu0 0.0
        %1588 = vmatpush1.msra.mxu0 0.0
        %1589 = vmatprep.subr.mxu0 0.0
        %1590 = vmatpush1.msra.mxu0 0.0
        %1591 = vmatprep.subr.mxu0 0.0
        %1592 = vmatpush1.msra.mxu0 0.0
        %1593 = vmatprep.subr.mxu0 0.0
        %1594 = vmatpush1.msra.mxu0 0.0
        %1595 = vmatprep.subr.mxu0 0.0
        %1596 = vmatpush1.msra.mxu0 0.0
        %1597 = vmatprep.subr.mxu0 0.0
        %1598 = vmatpush1.msra.mxu0 0.0
        %1599 = vmatprep.subr.mxu0 0.0
        %1600 = vmatpush1.msra.mxu0 0.0
        %1601 = vmatprep.subr.mxu0 0.0
        %1602 = vmatpush1.msra.mxu0 0.0
        %1603 = vmatprep.subr.mxu0 0.0
        %1604 = vmatpush1.msra.mxu0 0.0
        %1605 = vmatprep.subr.mxu0 0.0
        %1606 = vmatpush1.msra.mxu0 0.0
        %1607 = vmatprep.subr.mxu0 0.0
        %1608 = vmatpush1.msra.mxu0 0.0
        %1609 = vmatprep.subr.mxu0 0.0
        %1610 = vmatpush1.msra.mxu0 0.0
        %1611 = vmatprep.mubr.f32.mxu0 0.0
        %1612 = vmatmul.mubr.f32.gmra.mrb[0].mxu0 %v1524
        %v1613 = vpop.f32.mrb[0].mxu0
        %v1614 = vadd.f32 %v1486, %v1613
        %v1615 = vpop.f32.mrb[0].mxu0
        %v1616 = vadd.f32 %v1486, %v1615
        %1617 = vmatprep.mubr.f32.mxu0 0.0
        %1618 = vmatmul.mubr.f32.gmra.mrb[0].mxu0 %v1527
        %v1619 = vpop.f32.mrb[0].mxu0
        %v1620 = vadd.f32 %v1491, %v1619
        %v1621 = vpop.f32.mrb[0].mxu0
        %v1622 = vadd.f32 %v1491, %v1621
        %1623 = vmatprep.mubr.f32.mxu0 0.0
        %1624 = vmatmul.mubr.f32.gmra.mrb[0].mxu0 %v1530
        %v1625 = vpop.f32.mrb[0].mxu0
        %v1626 = vadd.f32 %v1496, %v1625
        %v1627 = vpop.f32.mrb[0].mxu0
        %v1628 = vadd.f32 %v1496, %v1627
        %1629 = vmatprep.mubr.f32.mxu0 0.0
        %1630 = vmatmul.mubr.f32.gmra.mrb[0].mxu0 %v1533
        %v1631 = vpop.f32.mrb[0].mxu0
        %v1632 = vadd.f32 %v1501, %v1631
        %v1633 = vpop.f32.mrb[0].mxu0
        %v1634 = vadd.f32 %v1501, %v1633
        %1635 = vmatprep.mubr.f32.mxu0 0.0
        %1636 = vmatmul.mubr.f32.gmra.mrb[0].mxu0 %v1536
        %v1637 = vpop.f32.mrb[0].mxu0
        %v1638 = vadd.f32 %v1506, %v1637
        %v1639 = vpop.f32.mrb[0].mxu0
        %v1640 = vadd.f32 %v1506, %v1639
        %1641 = vmatprep.mubr.f32.mxu0 0.0
        %1642 = vmatmul.mubr.f32.gmra.mrb[0].mxu0 %v1539
        %v1643 = vpop.f32.mrb[0].mxu0
        %v1644 = vadd.f32 %v1511, %v1643
        %v1645 = vpop.f32.mrb[0].mxu0
        %v1646 = vadd.f32 %v1511, %v1645
        %1647 = vmatprep.mubr.f32.mxu0 0.0
        %1648 = vmatmul.mubr.f32.gmra.mrb[0].mxu0 %v1542
        %v1649 = vpop.f32.mrb[0].mxu0
        %v1650 = vadd.f32 %v1516, %v1649
        %v1651 = vpop.f32.mrb[0].mxu0
        %v1652 = vadd.f32 %v1516, %v1651
        %1653 = vmatprep.mubr.f32.mxu0 0.0
        %1654 = vmatmul.mubr.f32.gmra.mrb[0].mxu0 %v1545
        %v1655 = vpop.f32.mrb[0].mxu0
        %v1656 = vadd.f32 %v1521, %v1655
        %v1657 = vpop.f32.mrb[0].mxu0
        %v1658 = vadd.f32 %v1521, %v1657
        %1659 = vdwg.mxu0
        %s1660 = scalar_lea.vmem %s5, 16
        %v1661 = vld [vmem:[%s1660] sm:$0xff]
        %v1662 = vld [vmem:[%s1660 + $0x8] sm:$0xff]
        %s1663 = scalar_lea.vmem %s6, 16
        %v1664 = vld [vmem:[%s1663] sm:$0xff]
        %v1665 = vld [vmem:[%s1663 + $0x8] sm:$0xff]
        %1667 = vset.pattern.permute.xlu0 0
        %1668 = vperm.xlu0 %1667, %v1664
        %v1669 = vpop.permute.xlu0 %1668
        %1672 = vset.pattern.permute.xlu0 0
        %1673 = vperm.xlu0 %1672, %v1665
        %v1674 = vpop.permute.xlu0 %1673
        %v1677 = vsel %vm587, %v1661, 0
        %v1680 = vsel %vm587, %v1662, 0
        %1682 = vmatprep.subr.mxu0 %v1616
        %1683 = vmatpush1.msra.mxu0 %v1614
        %1684 = vmatprep.subr.mxu0 %v1622
        %1685 = vmatpush1.msra.mxu0 %v1620
        %1686 = vmatprep.subr.mxu0 %v1628
        %1687 = vmatpush1.msra.mxu0 %v1626
        %1688 = vmatprep.subr.mxu0 %v1634
        %1689 = vmatpush1.msra.mxu0 %v1632
        %1690 = vmatprep.subr.mxu0 %v1640
        %1691 = vmatpush1.msra.mxu0 %v1638
        %1692 = vmatprep.subr.mxu0 %v1646
        %1693 = vmatpush1.msra.mxu0 %v1644
        %1694 = vmatprep.subr.mxu0 %v1652
        %1695 = vmatpush1.msra.mxu0 %v1650
        %1696 = vmatprep.subr.mxu0 %v1658
        %1697 = vmatpush1.msra.mxu0 %v1656
        %1698 = vmatprep.subr.mxu0 0.0
        %1699 = vmatpush1.msra.mxu0 0.0
        %1700 = vmatprep.subr.mxu0 0.0
        %1701 = vmatpush1.msra.mxu0 0.0
        %1702 = vmatprep.subr.mxu0 0.0
        %1703 = vmatpush1.msra.mxu0 0.0
        %1704 = vmatprep.subr.mxu0 0.0
        %1705 = vmatpush1.msra.mxu0 0.0
        %1706 = vmatprep.subr.mxu0 0.0
        %1707 = vmatpush1.msra.mxu0 0.0
        %1708 = vmatprep.subr.mxu0 0.0
        %1709 = vmatpush1.msra.mxu0 0.0
        %1710 = vmatprep.subr.mxu0 0.0
        %1711 = vmatpush1.msra.mxu0 0.0
        %1712 = vmatprep.subr.mxu0 0.0
        %1713 = vmatpush1.msra.mxu0 0.0
        %1714 = vmatprep.subr.mxu0 0.0
        %1715 = vmatpush1.msra.mxu0 0.0
        %1716 = vmatprep.subr.mxu0 0.0
        %1717 = vmatpush1.msra.mxu0 0.0
        %1718 = vmatprep.subr.mxu0 0.0
        %1719 = vmatpush1.msra.mxu0 0.0
        %1720 = vmatprep.subr.mxu0 0.0
        %1721 = vmatpush1.msra.mxu0 0.0
        %1722 = vmatprep.subr.mxu0 0.0
        %1723 = vmatpush1.msra.mxu0 0.0
        %1724 = vmatprep.subr.mxu0 0.0
        %1725 = vmatpush1.msra.mxu0 0.0
        %1726 = vmatprep.subr.mxu0 0.0
        %1727 = vmatpush1.msra.mxu0 0.0
        %1728 = vmatprep.subr.mxu0 0.0
        %1729 = vmatpush1.msra.mxu0 0.0
        %1730 = vmatprep.subr.mxu0 0.0
        %1731 = vmatpush1.msra.mxu0 0.0
        %1732 = vmatprep.subr.mxu0 0.0
        %1733 = vmatpush1.msra.mxu0 0.0
        %1734 = vmatprep.subr.mxu0 0.0
        %1735 = vmatpush1.msra.mxu0 0.0
        %1736 = vmatprep.subr.mxu0 0.0
        %1737 = vmatpush1.msra.mxu0 0.0
        %1738 = vmatprep.subr.mxu0 0.0
        %1739 = vmatpush1.msra.mxu0 0.0
        %1740 = vmatprep.subr.mxu0 0.0
        %1741 = vmatpush1.msra.mxu0 0.0
        %1742 = vmatprep.subr.mxu0 0.0
        %1743 = vmatpush1.msra.mxu0 0.0
        %1744 = vmatprep.subr.mxu0 0.0
        %1745 = vmatpush1.msra.mxu0 0.0
        %1746 = vmatprep.mubr.f32.mxu0 0.0
        %1747 = vmatmul.mubr.f32.gmra.mrb[0].mxu0 %v1677
        %v1748 = vpop.f32.mrb[0].mxu0
        %v1749 = vadd.f32 %v1669, %v1748
        %v1750 = vpop.f32.mrb[0].mxu0
        %v1751 = vadd.f32 %v1669, %v1750
        %1752 = vmatprep.mubr.f32.mxu0 0.0
        %1753 = vmatmul.mubr.f32.gmra.mrb[0].mxu0 %v1680
        %v1754 = vpop.f32.mrb[0].mxu0
        %v1755 = vadd.f32 %v1674, %v1754
        %v1756 = vpop.f32.mrb[0].mxu0
        %v1757 = vadd.f32 %v1674, %v1756
        %1758 = vdwg.mxu0
        %v1759 = vsub.f32 0.0, %v1749
        %v1760 = vsub.f32 0.0, %v1751
        %v1761 = vmul.f32 %v1759, 1.442695
        %v1762 = vpow.pop %v1761
        %v1763 = vmul.f32 %v1760, 1.442695
        %v1764 = vpow.pop %v1763
        %v1765 = vsub.f32 %v1041, %v1755
        %v1766 = vsub.f32 %v1042, %v1757
        %v1767 = vmul.f32 %v1762, %v1765
        %v1768 = vmul.f32 %v1764, %v1766
        %v1769 = vsub.f32 %v1033, %v1749
        %v1770 = vsub.f32 %v1034, %v1751
        %s1771 = scalar_lea.vmem %s1, 128
        %v1772 = vld [vmem:[%s1771] sm:$0xff]
        %v1773 = vld [vmem:[%s1771 + $0x8] sm:$0xff]
        %v1774 = vld [vmem:[%s1771 + $0x10] sm:$0xff]
        %v1775 = vld [vmem:[%s1771 + $0x18] sm:$0xff]
        %v1776 = vld [vmem:[%s1771 + $0x20] sm:$0xff]
        %v1777 = vld [vmem:[%s1771 + $0x28] sm:$0xff]
        %v1778 = vld [vmem:[%s1771 + $0x30] sm:$0xff]
        %v1779 = vld [vmem:[%s1771 + $0x38] sm:$0xff]
        %s1780 = scalar_lea.vmem %s2, 128
        %v1781 = vld [vmem:[%s1780] sm:$0xff]
        %v1782 = vld [vmem:[%s1780 + $0x8] sm:$0xff]
        %v1783 = vld [vmem:[%s1780 + $0x10] sm:$0xff]
        %v1784 = vld [vmem:[%s1780 + $0x18] sm:$0xff]
        %v1785 = vld [vmem:[%s1780 + $0x20] sm:$0xff]
        %v1786 = vld [vmem:[%s1780 + $0x28] sm:$0xff]
        %v1787 = vld [vmem:[%s1780 + $0x30] sm:$0xff]
        %v1788 = vld [vmem:[%s1780 + $0x38] sm:$0xff]
        %1790 = vset.pattern.permute.xlu0 0
        %1791 = vperm.xlu0 %1790, %v1781
        %v1792 = vpop.permute.xlu0 %1791
        %1795 = vset.pattern.permute.xlu0 0
        %1796 = vperm.xlu0 %1795, %v1782
        %v1797 = vpop.permute.xlu0 %1796
        %1800 = vset.pattern.permute.xlu0 0
        %1801 = vperm.xlu0 %1800, %v1783
        %v1802 = vpop.permute.xlu0 %1801
        %1805 = vset.pattern.permute.xlu0 0
        %1806 = vperm.xlu0 %1805, %v1784
        %v1807 = vpop.permute.xlu0 %1806
        %1810 = vset.pattern.permute.xlu0 0
        %1811 = vperm.xlu0 %1810, %v1785
        %v1812 = vpop.permute.xlu0 %1811
        %1815 = vset.pattern.permute.xlu0 0
        %1816 = vperm.xlu0 %1815, %v1786
        %v1817 = vpop.permute.xlu0 %1816
        %1820 = vset.pattern.permute.xlu0 0
        %1821 = vperm.xlu0 %1820, %v1787
        %v1822 = vpop.permute.xlu0 %1821
        %1825 = vset.pattern.permute.xlu0 0
        %1826 = vperm.xlu0 %1825, %v1788
        %v1827 = vpop.permute.xlu0 %1826
        %v1830 = vsel %vm377, %v1772, 0
        %v1833 = vsel %vm377, %v1773, 0
        %v1836 = vsel %vm377, %v1774, 0
        %v1839 = vsel %vm377, %v1775, 0
        %v1842 = vsel %vm377, %v1776, 0
        %v1845 = vsel %vm377, %v1777, 0
        %v1848 = vsel %vm377, %v1778, 0
        %v1851 = vsel %vm377, %v1779, 0
        %1853 = vmatprep.subr.mxu0 %v1768
        %1854 = vmatpush1.msra.mxu0 %v1767
        %1855 = vmatprep.subr.mxu0 0.0
        %1856 = vmatpush1.msra.mxu0 0.0
        %1857 = vmatprep.subr.mxu0 0.0
        %1858 = vmatpush1.msra.mxu0 0.0
        %1859 = vmatprep.subr.mxu0 0.0
        %1860 = vmatpush1.msra.mxu0 0.0
        %1861 = vmatprep.subr.mxu0 0.0
        %1862 = vmatpush1.msra.mxu0 0.0
        %1863 = vmatprep.subr.mxu0 0.0
        %1864 = vmatpush1.msra.mxu0 0.0
        %1865 = vmatprep.subr.mxu0 0.0
        %1866 = vmatpush1.msra.mxu0 0.0
        %1867 = vmatprep.subr.mxu0 0.0
        %1868 = vmatpush1.msra.mxu0 0.0
        %1869 = vmatprep.subr.mxu0 0.0
        %1870 = vmatpush1.msra.mxu0 0.0
        %1871 = vmatprep.subr.mxu0 0.0
        %1872 = vmatpush1.msra.mxu0 0.0
        %1873 = vmatprep.subr.mxu0 0.0
        %1874 = vmatpush1.msra.mxu0 0.0
        %1875 = vmatprep.subr.mxu0 0.0
        %1876 = vmatpush1.msra.mxu0 0.0
        %1877 = vmatprep.subr.mxu0 0.0
        %1878 = vmatpush1.msra.mxu0 0.0
        %1879 = vmatprep.subr.mxu0 0.0
        %1880 = vmatpush1.msra.mxu0 0.0
        %1881 = vmatprep.subr.mxu0 0.0
        %1882 = vmatpush1.msra.mxu0 0.0
        %1883 = vmatprep.subr.mxu0 0.0
        %1884 = vmatpush1.msra.mxu0 0.0
        %1885 = vmatprep.subr.mxu0 0.0
        %1886 = vmatpush1.msra.mxu0 0.0
        %1887 = vmatprep.subr.mxu0 0.0
        %1888 = vmatpush1.msra.mxu0 0.0
        %1889 = vmatprep.subr.mxu0 0.0
        %1890 = vmatpush1.msra.mxu0 0.0
        %1891 = vmatprep.subr.mxu0 0.0
        %1892 = vmatpush1.msra.mxu0 0.0
        %1893 = vmatprep.subr.mxu0 0.0
        %1894 = vmatpush1.msra.mxu0 0.0
        %1895 = vmatprep.subr.mxu0 0.0
        %1896 = vmatpush1.msra.mxu0 0.0
        %1897 = vmatprep.subr.mxu0 0.0
        %1898 = vmatpush1.msra.mxu0 0.0
        %1899 = vmatprep.subr.mxu0 0.0
        %1900 = vmatpush1.msra.mxu0 0.0
        %1901 = vmatprep.subr.mxu0 0.0
        %1902 = vmatpush1.msra.mxu0 0.0
        %1903 = vmatprep.subr.mxu0 0.0
        %1904 = vmatpush1.msra.mxu0 0.0
        %1905 = vmatprep.subr.mxu0 0.0
        %1906 = vmatpush1.msra.mxu0 0.0
        %1907 = vmatprep.subr.mxu0 0.0
        %1908 = vmatpush1.msra.mxu0 0.0
        %1909 = vmatprep.subr.mxu0 0.0
        %1910 = vmatpush1.msra.mxu0 0.0
        %1911 = vmatprep.subr.mxu0 0.0
        %1912 = vmatpush1.msra.mxu0 0.0
        %1913 = vmatprep.subr.mxu0 0.0
        %1914 = vmatpush1.msra.mxu0 0.0
        %1915 = vmatprep.subr.mxu0 0.0
        %1916 = vmatpush1.msra.mxu0 0.0
        %1917 = vmatprep.mubr.f32.mxu0 0.0
        %1918 = vmatmul.mubr.f32.gmra.mrb[0].mxu0 %v1830
        %v1919 = vpop.f32.mrb[0].mxu0
        %v1920 = vadd.f32 %v1792, %v1919
        %v1921 = vpop.f32.mrb[0].mxu0
        %v1922 = vadd.f32 %v1792, %v1921
        %1923 = vmatprep.mubr.f32.mxu0 0.0
        %1924 = vmatmul.mubr.f32.gmra.mrb[0].mxu0 %v1833
        %v1925 = vpop.f32.mrb[0].mxu0
        %v1926 = vadd.f32 %v1797, %v1925
        %v1927 = vpop.f32.mrb[0].mxu0
        %v1928 = vadd.f32 %v1797, %v1927
        %1929 = vmatprep.mubr.f32.mxu0 0.0
        %1930 = vmatmul.mubr.f32.gmra.mrb[0].mxu0 %v1836
        %v1931 = vpop.f32.mrb[0].mxu0
        %v1932 = vadd.f32 %v1802, %v1931
        %v1933 = vpop.f32.mrb[0].mxu0
        %v1934 = vadd.f32 %v1802, %v1933
        %1935 = vmatprep.mubr.f32.mxu0 0.0
        %1936 = vmatmul.mubr.f32.gmra.mrb[0].mxu0 %v1839
        %v1937 = vpop.f32.mrb[0].mxu0
        %v1938 = vadd.f32 %v1807, %v1937
        %v1939 = vpop.f32.mrb[0].mxu0
        %v1940 = vadd.f32 %v1807, %v1939
        %1941 = vmatprep.mubr.f32.mxu0 0.0
        %1942 = vmatmul.mubr.f32.gmra.mrb[0].mxu0 %v1842
        %v1943 = vpop.f32.mrb[0].mxu0
        %v1944 = vadd.f32 %v1812, %v1943
        %v1945 = vpop.f32.mrb[0].mxu0
        %v1946 = vadd.f32 %v1812, %v1945
        %1947 = vmatprep.mubr.f32.mxu0 0.0
        %1948 = vmatmul.mubr.f32.gmra.mrb[0].mxu0 %v1845
        %v1949 = vpop.f32.mrb[0].mxu0
        %v1950 = vadd.f32 %v1817, %v1949
        %v1951 = vpop.f32.mrb[0].mxu0
        %v1952 = vadd.f32 %v1817, %v1951
        %1953 = vmatprep.mubr.f32.mxu0 0.0
        %1954 = vmatmul.mubr.f32.gmra.mrb[0].mxu0 %v1848
        %v1955 = vpop.f32.mrb[0].mxu0
        %v1956 = vadd.f32 %v1822, %v1955
        %v1957 = vpop.f32.mrb[0].mxu0
        %v1958 = vadd.f32 %v1822, %v1957
        %1959 = vmatprep.mubr.f32.mxu0 0.0
        %1960 = vmatmul.mubr.f32.gmra.mrb[0].mxu0 %v1851
        %v1961 = vpop.f32.mrb[0].mxu0
        %v1962 = vadd.f32 %v1827, %v1961
        %v1963 = vpop.f32.mrb[0].mxu0
        %v1964 = vadd.f32 %v1827, %v1963
        %1965 = vdwg.mxu0
        %v1966 = vtanh.pop %v1920
        %v1967 = vtanh.pop %v1922
        %v1968 = vtanh.pop %v1926
        %v1969 = vtanh.pop %v1928
        %v1970 = vtanh.pop %v1932
        %v1971 = vtanh.pop %v1934
        %v1972 = vtanh.pop %v1938
        %v1973 = vtanh.pop %v1940
        %v1974 = vmax.f32 %v1944, 0.0
        %v1975 = vmax.f32 %v1946, 0.0
        %v1976 = vmax.f32 %v1950, 0.0
        %v1977 = vmax.f32 %v1952, 0.0
        %v1978 = vmax.f32 %v1956, 0.0
        %v1979 = vmax.f32 %v1958, 0.0
        %v1980 = vmax.f32 %v1962, 0.0
        %v1981 = vmax.f32 %v1964, 0.0
        %s1982 = scalar_lea.vmem %s3, 256
        %v1983 = vld [vmem:[%s1982] sm:$0xff]
        %v1984 = vld [vmem:[%s1982 + $0x8] sm:$0xff]
        %v1985 = vld [vmem:[%s1982 + $0x10] sm:$0xff]
        %v1986 = vld [vmem:[%s1982 + $0x18] sm:$0xff]
        %v1987 = vld [vmem:[%s1982 + $0x20] sm:$0xff]
        %v1988 = vld [vmem:[%s1982 + $0x28] sm:$0xff]
        %v1989 = vld [vmem:[%s1982 + $0x30] sm:$0xff]
        %v1990 = vld [vmem:[%s1982 + $0x38] sm:$0xff]
        %s1991 = scalar_lea.vmem %s4, 256
        %v1992 = vld [vmem:[%s1991] sm:$0xff]
        %v1993 = vld [vmem:[%s1991 + $0x8] sm:$0xff]
        %v1994 = vld [vmem:[%s1991 + $0x10] sm:$0xff]
        %v1995 = vld [vmem:[%s1991 + $0x18] sm:$0xff]
        %v1996 = vld [vmem:[%s1991 + $0x20] sm:$0xff]
        %v1997 = vld [vmem:[%s1991 + $0x28] sm:$0xff]
        %v1998 = vld [vmem:[%s1991 + $0x30] sm:$0xff]
        %v1999 = vld [vmem:[%s1991 + $0x38] sm:$0xff]
        %2001 = vset.pattern.permute.xlu0 0
        %2002 = vperm.xlu0 %2001, %v1992
        %v2003 = vpop.permute.xlu0 %2002
        %2006 = vset.pattern.permute.xlu0 0
        %2007 = vperm.xlu0 %2006, %v1993
        %v2008 = vpop.permute.xlu0 %2007
        %2011 = vset.pattern.permute.xlu0 0
        %2012 = vperm.xlu0 %2011, %v1994
        %v2013 = vpop.permute.xlu0 %2012
        %2016 = vset.pattern.permute.xlu0 0
        %2017 = vperm.xlu0 %2016, %v1995
        %v2018 = vpop.permute.xlu0 %2017
        %2021 = vset.pattern.permute.xlu0 0
        %2022 = vperm.xlu0 %2021, %v1996
        %v2023 = vpop.permute.xlu0 %2022
        %2026 = vset.pattern.permute.xlu0 0
        %2027 = vperm.xlu0 %2026, %v1997
        %v2028 = vpop.permute.xlu0 %2027
        %2031 = vset.pattern.permute.xlu0 0
        %2032 = vperm.xlu0 %2031, %v1998
        %v2033 = vpop.permute.xlu0 %2032
        %2036 = vset.pattern.permute.xlu0 0
        %2037 = vperm.xlu0 %2036, %v1999
        %v2038 = vpop.permute.xlu0 %2037
        %v2041 = vsel %vm587, %v1983, 0
        %v2044 = vsel %vm587, %v1984, 0
        %v2047 = vsel %vm587, %v1985, 0
        %v2050 = vsel %vm587, %v1986, 0
        %v2053 = vsel %vm587, %v1987, 0
        %v2056 = vsel %vm587, %v1988, 0
        %v2059 = vsel %vm587, %v1989, 0
        %v2062 = vsel %vm587, %v1990, 0
        %2064 = vmatprep.subr.mxu0 %v1967
        %2065 = vmatpush1.msra.mxu0 %v1966
        %2066 = vmatprep.subr.mxu0 %v1969
        %2067 = vmatpush1.msra.mxu0 %v1968
        %2068 = vmatprep.subr.mxu0 %v1971
        %2069 = vmatpush1.msra.mxu0 %v1970
        %2070 = vmatprep.subr.mxu0 %v1973
        %2071 = vmatpush1.msra.mxu0 %v1972
        %2072 = vmatprep.subr.mxu0 %v1975
        %2073 = vmatpush1.msra.mxu0 %v1974
        %2074 = vmatprep.subr.mxu0 %v1977
        %2075 = vmatpush1.msra.mxu0 %v1976
        %2076 = vmatprep.subr.mxu0 %v1979
        %2077 = vmatpush1.msra.mxu0 %v1978
        %2078 = vmatprep.subr.mxu0 %v1981
        %2079 = vmatpush1.msra.mxu0 %v1980
        %2080 = vmatprep.subr.mxu0 0.0
        %2081 = vmatpush1.msra.mxu0 0.0
        %2082 = vmatprep.subr.mxu0 0.0
        %2083 = vmatpush1.msra.mxu0 0.0
        %2084 = vmatprep.subr.mxu0 0.0
        %2085 = vmatpush1.msra.mxu0 0.0
        %2086 = vmatprep.subr.mxu0 0.0
        %2087 = vmatpush1.msra.mxu0 0.0
        %2088 = vmatprep.subr.mxu0 0.0
        %2089 = vmatpush1.msra.mxu0 0.0
        %2090 = vmatprep.subr.mxu0 0.0
        %2091 = vmatpush1.msra.mxu0 0.0
        %2092 = vmatprep.subr.mxu0 0.0
        %2093 = vmatpush1.msra.mxu0 0.0
        %2094 = vmatprep.subr.mxu0 0.0
        %2095 = vmatpush1.msra.mxu0 0.0
        %2096 = vmatprep.subr.mxu0 0.0
        %2097 = vmatpush1.msra.mxu0 0.0
        %2098 = vmatprep.subr.mxu0 0.0
        %2099 = vmatpush1.msra.mxu0 0.0
        %2100 = vmatprep.subr.mxu0 0.0
        %2101 = vmatpush1.msra.mxu0 0.0
        %2102 = vmatprep.subr.mxu0 0.0
        %2103 = vmatpush1.msra.mxu0 0.0
        %2104 = vmatprep.subr.mxu0 0.0
        %2105 = vmatpush1.msra.mxu0 0.0
        %2106 = vmatprep.subr.mxu0 0.0
        %2107 = vmatpush1.msra.mxu0 0.0
        %2108 = vmatprep.subr.mxu0 0.0
        %2109 = vmatpush1.msra.mxu0 0.0
        %2110 = vmatprep.subr.mxu0 0.0
        %2111 = vmatpush1.msra.mxu0 0.0
        %2112 = vmatprep.subr.mxu0 0.0
        %2113 = vmatpush1.msra.mxu0 0.0
        %2114 = vmatprep.subr.mxu0 0.0
        %2115 = vmatpush1.msra.mxu0 0.0
        %2116 = vmatprep.subr.mxu0 0.0
        %2117 = vmatpush1.msra.mxu0 0.0
        %2118 = vmatprep.subr.mxu0 0.0
        %2119 = vmatpush1.msra.mxu0 0.0
        %2120 = vmatprep.subr.mxu0 0.0
        %2121 = vmatpush1.msra.mxu0 0.0
        %2122 = vmatprep.subr.mxu0 0.0
        %2123 = vmatpush1.msra.mxu0 0.0
        %2124 = vmatprep.subr.mxu0 0.0
        %2125 = vmatpush1.msra.mxu0 0.0
        %2126 = vmatprep.subr.mxu0 0.0
        %2127 = vmatpush1.msra.mxu0 0.0
        %2128 = vmatprep.mubr.f32.mxu0 0.0
        %2129 = vmatmul.mubr.f32.gmra.mrb[0].mxu0 %v2041
        %v2130 = vpop.f32.mrb[0].mxu0
        %v2131 = vadd.f32 %v2003, %v2130
        %v2132 = vpop.f32.mrb[0].mxu0
        %v2133 = vadd.f32 %v2003, %v2132
        %2134 = vmatprep.mubr.f32.mxu0 0.0
        %2135 = vmatmul.mubr.f32.gmra.mrb[0].mxu0 %v2044
        %v2136 = vpop.f32.mrb[0].mxu0
        %v2137 = vadd.f32 %v2008, %v2136
        %v2138 = vpop.f32.mrb[0].mxu0
        %v2139 = vadd.f32 %v2008, %v2138
        %2140 = vmatprep.mubr.f32.mxu0 0.0
        %2141 = vmatmul.mubr.f32.gmra.mrb[0].mxu0 %v2047
        %v2142 = vpop.f32.mrb[0].mxu0
        %v2143 = vadd.f32 %v2013, %v2142
        %v2144 = vpop.f32.mrb[0].mxu0
        %v2145 = vadd.f32 %v2013, %v2144
        %2146 = vmatprep.mubr.f32.mxu0 0.0
        %2147 = vmatmul.mubr.f32.gmra.mrb[0].mxu0 %v2050
        %v2148 = vpop.f32.mrb[0].mxu0
        %v2149 = vadd.f32 %v2018, %v2148
        %v2150 = vpop.f32.mrb[0].mxu0
        %v2151 = vadd.f32 %v2018, %v2150
        %2152 = vmatprep.mubr.f32.mxu0 0.0
        %2153 = vmatmul.mubr.f32.gmra.mrb[0].mxu0 %v2053
        %v2154 = vpop.f32.mrb[0].mxu0
        %v2155 = vadd.f32 %v2023, %v2154
        %v2156 = vpop.f32.mrb[0].mxu0
        %v2157 = vadd.f32 %v2023, %v2156
        %2158 = vmatprep.mubr.f32.mxu0 0.0
        %2159 = vmatmul.mubr.f32.gmra.mrb[0].mxu0 %v2056
        %v2160 = vpop.f32.mrb[0].mxu0
        %v2161 = vadd.f32 %v2028, %v2160
        %v2162 = vpop.f32.mrb[0].mxu0
        %v2163 = vadd.f32 %v2028, %v2162
        %2164 = vmatprep.mubr.f32.mxu0 0.0
        %2165 = vmatmul.mubr.f32.gmra.mrb[0].mxu0 %v2059
        %v2166 = vpop.f32.mrb[0].mxu0
        %v2167 = vadd.f32 %v2033, %v2166
        %v2168 = vpop.f32.mrb[0].mxu0
        %v2169 = vadd.f32 %v2033, %v2168
        %2170 = vmatprep.mubr.f32.mxu0 0.0
        %2171 = vmatmul.mubr.f32.gmra.mrb[0].mxu0 %v2062
        %v2172 = vpop.f32.mrb[0].mxu0
        %v2173 = vadd.f32 %v2038, %v2172
        %v2174 = vpop.f32.mrb[0].mxu0
        %v2175 = vadd.f32 %v2038, %v2174
        %2176 = vdwg.mxu0
        %v2177 = vtanh.pop %v2131
        %v2178 = vtanh.pop %v2133
        %v2179 = vtanh.pop %v2137
        %v2180 = vtanh.pop %v2139
        %v2181 = vtanh.pop %v2143
        %v2182 = vtanh.pop %v2145
        %v2183 = vtanh.pop %v2149
        %v2184 = vtanh.pop %v2151
        %v2185 = vmax.f32 %v2155, 0.0
        %v2186 = vmax.f32 %v2157, 0.0
        %v2187 = vmax.f32 %v2161, 0.0
        %v2188 = vmax.f32 %v2163, 0.0
        %v2189 = vmax.f32 %v2167, 0.0
        %v2190 = vmax.f32 %v2169, 0.0
        %v2191 = vmax.f32 %v2173, 0.0
        %v2192 = vmax.f32 %v2175, 0.0
        %s2193 = scalar_lea.vmem %s3, 320
        %v2194 = vld [vmem:[%s2193] sm:$0xff]
        %v2195 = vld [vmem:[%s2193 + $0x8] sm:$0xff]
        %v2196 = vld [vmem:[%s2193 + $0x10] sm:$0xff]
        %v2197 = vld [vmem:[%s2193 + $0x18] sm:$0xff]
        %v2198 = vld [vmem:[%s2193 + $0x20] sm:$0xff]
        %v2199 = vld [vmem:[%s2193 + $0x28] sm:$0xff]
        %v2200 = vld [vmem:[%s2193 + $0x30] sm:$0xff]
        %v2201 = vld [vmem:[%s2193 + $0x38] sm:$0xff]
        %s2202 = scalar_lea.vmem %s4, 320
        %v2203 = vld [vmem:[%s2202] sm:$0xff]
        %v2204 = vld [vmem:[%s2202 + $0x8] sm:$0xff]
        %v2205 = vld [vmem:[%s2202 + $0x10] sm:$0xff]
        %v2206 = vld [vmem:[%s2202 + $0x18] sm:$0xff]
        %v2207 = vld [vmem:[%s2202 + $0x20] sm:$0xff]
        %v2208 = vld [vmem:[%s2202 + $0x28] sm:$0xff]
        %v2209 = vld [vmem:[%s2202 + $0x30] sm:$0xff]
        %v2210 = vld [vmem:[%s2202 + $0x38] sm:$0xff]
        %2212 = vset.pattern.permute.xlu0 0
        %2213 = vperm.xlu0 %2212, %v2203
        %v2214 = vpop.permute.xlu0 %2213
        %2217 = vset.pattern.permute.xlu0 0
        %2218 = vperm.xlu0 %2217, %v2204
        %v2219 = vpop.permute.xlu0 %2218
        %2222 = vset.pattern.permute.xlu0 0
        %2223 = vperm.xlu0 %2222, %v2205
        %v2224 = vpop.permute.xlu0 %2223
        %2227 = vset.pattern.permute.xlu0 0
        %2228 = vperm.xlu0 %2227, %v2206
        %v2229 = vpop.permute.xlu0 %2228
        %2232 = vset.pattern.permute.xlu0 0
        %2233 = vperm.xlu0 %2232, %v2207
        %v2234 = vpop.permute.xlu0 %2233
        %2237 = vset.pattern.permute.xlu0 0
        %2238 = vperm.xlu0 %2237, %v2208
        %v2239 = vpop.permute.xlu0 %2238
        %2242 = vset.pattern.permute.xlu0 0
        %2243 = vperm.xlu0 %2242, %v2209
        %v2244 = vpop.permute.xlu0 %2243
        %2247 = vset.pattern.permute.xlu0 0
        %2248 = vperm.xlu0 %2247, %v2210
        %v2249 = vpop.permute.xlu0 %2248
        %v2252 = vsel %vm587, %v2194, 0
        %v2255 = vsel %vm587, %v2195, 0
        %v2258 = vsel %vm587, %v2196, 0
        %v2261 = vsel %vm587, %v2197, 0
        %v2264 = vsel %vm587, %v2198, 0
        %v2267 = vsel %vm587, %v2199, 0
        %v2270 = vsel %vm587, %v2200, 0
        %v2273 = vsel %vm587, %v2201, 0
        %2275 = vmatprep.subr.mxu0 %v2178
        %2276 = vmatpush1.msra.mxu0 %v2177
        %2277 = vmatprep.subr.mxu0 %v2180
        %2278 = vmatpush1.msra.mxu0 %v2179
        %2279 = vmatprep.subr.mxu0 %v2182
        %2280 = vmatpush1.msra.mxu0 %v2181
        %2281 = vmatprep.subr.mxu0 %v2184
        %2282 = vmatpush1.msra.mxu0 %v2183
        %2283 = vmatprep.subr.mxu0 %v2186
        %2284 = vmatpush1.msra.mxu0 %v2185
        %2285 = vmatprep.subr.mxu0 %v2188
        %2286 = vmatpush1.msra.mxu0 %v2187
        %2287 = vmatprep.subr.mxu0 %v2190
        %2288 = vmatpush1.msra.mxu0 %v2189
        %2289 = vmatprep.subr.mxu0 %v2192
        %2290 = vmatpush1.msra.mxu0 %v2191
        %2291 = vmatprep.subr.mxu0 0.0
        %2292 = vmatpush1.msra.mxu0 0.0
        %2293 = vmatprep.subr.mxu0 0.0
        %2294 = vmatpush1.msra.mxu0 0.0
        %2295 = vmatprep.subr.mxu0 0.0
        %2296 = vmatpush1.msra.mxu0 0.0
        %2297 = vmatprep.subr.mxu0 0.0
        %2298 = vmatpush1.msra.mxu0 0.0
        %2299 = vmatprep.subr.mxu0 0.0
        %2300 = vmatpush1.msra.mxu0 0.0
        %2301 = vmatprep.subr.mxu0 0.0
        %2302 = vmatpush1.msra.mxu0 0.0
        %2303 = vmatprep.subr.mxu0 0.0
        %2304 = vmatpush1.msra.mxu0 0.0
        %2305 = vmatprep.subr.mxu0 0.0
        %2306 = vmatpush1.msra.mxu0 0.0
        %2307 = vmatprep.subr.mxu0 0.0
        %2308 = vmatpush1.msra.mxu0 0.0
        %2309 = vmatprep.subr.mxu0 0.0
        %2310 = vmatpush1.msra.mxu0 0.0
        %2311 = vmatprep.subr.mxu0 0.0
        %2312 = vmatpush1.msra.mxu0 0.0
        %2313 = vmatprep.subr.mxu0 0.0
        %2314 = vmatpush1.msra.mxu0 0.0
        %2315 = vmatprep.subr.mxu0 0.0
        %2316 = vmatpush1.msra.mxu0 0.0
        %2317 = vmatprep.subr.mxu0 0.0
        %2318 = vmatpush1.msra.mxu0 0.0
        %2319 = vmatprep.subr.mxu0 0.0
        %2320 = vmatpush1.msra.mxu0 0.0
        %2321 = vmatprep.subr.mxu0 0.0
        %2322 = vmatpush1.msra.mxu0 0.0
        %2323 = vmatprep.subr.mxu0 0.0
        %2324 = vmatpush1.msra.mxu0 0.0
        %2325 = vmatprep.subr.mxu0 0.0
        %2326 = vmatpush1.msra.mxu0 0.0
        %2327 = vmatprep.subr.mxu0 0.0
        %2328 = vmatpush1.msra.mxu0 0.0
        %2329 = vmatprep.subr.mxu0 0.0
        %2330 = vmatpush1.msra.mxu0 0.0
        %2331 = vmatprep.subr.mxu0 0.0
        %2332 = vmatpush1.msra.mxu0 0.0
        %2333 = vmatprep.subr.mxu0 0.0
        %2334 = vmatpush1.msra.mxu0 0.0
        %2335 = vmatprep.subr.mxu0 0.0
        %2336 = vmatpush1.msra.mxu0 0.0
        %2337 = vmatprep.subr.mxu0 0.0
        %2338 = vmatpush1.msra.mxu0 0.0
        %2339 = vmatprep.mubr.f32.mxu0 0.0
        %2340 = vmatmul.mubr.f32.gmra.mrb[0].mxu0 %v2252
        %v2341 = vpop.f32.mrb[0].mxu0
        %v2342 = vadd.f32 %v2214, %v2341
        %v2343 = vpop.f32.mrb[0].mxu0
        %v2344 = vadd.f32 %v2214, %v2343
        %2345 = vmatprep.mubr.f32.mxu0 0.0
        %2346 = vmatmul.mubr.f32.gmra.mrb[0].mxu0 %v2255
        %v2347 = vpop.f32.mrb[0].mxu0
        %v2348 = vadd.f32 %v2219, %v2347
        %v2349 = vpop.f32.mrb[0].mxu0
        %v2350 = vadd.f32 %v2219, %v2349
        %2351 = vmatprep.mubr.f32.mxu0 0.0
        %2352 = vmatmul.mubr.f32.gmra.mrb[0].mxu0 %v2258
        %v2353 = vpop.f32.mrb[0].mxu0
        %v2354 = vadd.f32 %v2224, %v2353
        %v2355 = vpop.f32.mrb[0].mxu0
        %v2356 = vadd.f32 %v2224, %v2355
        %2357 = vmatprep.mubr.f32.mxu0 0.0
        %2358 = vmatmul.mubr.f32.gmra.mrb[0].mxu0 %v2261
        %v2359 = vpop.f32.mrb[0].mxu0
        %v2360 = vadd.f32 %v2229, %v2359
        %v2361 = vpop.f32.mrb[0].mxu0
        %v2362 = vadd.f32 %v2229, %v2361
        %2363 = vmatprep.mubr.f32.mxu0 0.0
        %2364 = vmatmul.mubr.f32.gmra.mrb[0].mxu0 %v2264
        %v2365 = vpop.f32.mrb[0].mxu0
        %v2366 = vadd.f32 %v2234, %v2365
        %v2367 = vpop.f32.mrb[0].mxu0
        %v2368 = vadd.f32 %v2234, %v2367
        %2369 = vmatprep.mubr.f32.mxu0 0.0
        %2370 = vmatmul.mubr.f32.gmra.mrb[0].mxu0 %v2267
        %v2371 = vpop.f32.mrb[0].mxu0
        %v2372 = vadd.f32 %v2239, %v2371
        %v2373 = vpop.f32.mrb[0].mxu0
        %v2374 = vadd.f32 %v2239, %v2373
        %2375 = vmatprep.mubr.f32.mxu0 0.0
        %2376 = vmatmul.mubr.f32.gmra.mrb[0].mxu0 %v2270
        %v2377 = vpop.f32.mrb[0].mxu0
        %v2378 = vadd.f32 %v2244, %v2377
        %v2379 = vpop.f32.mrb[0].mxu0
        %v2380 = vadd.f32 %v2244, %v2379
        %2381 = vmatprep.mubr.f32.mxu0 0.0
        %2382 = vmatmul.mubr.f32.gmra.mrb[0].mxu0 %v2273
        %v2383 = vpop.f32.mrb[0].mxu0
        %v2384 = vadd.f32 %v2249, %v2383
        %v2385 = vpop.f32.mrb[0].mxu0
        %v2386 = vadd.f32 %v2249, %v2385
        %2387 = vdwg.mxu0
        %s2388 = scalar_lea.vmem %s5, 32
        %v2389 = vld [vmem:[%s2388] sm:$0xff]
        %v2390 = vld [vmem:[%s2388 + $0x8] sm:$0xff]
        %s2391 = scalar_lea.vmem %s6, 32
        %v2392 = vld [vmem:[%s2391] sm:$0xff]
        %v2393 = vld [vmem:[%s2391 + $0x8] sm:$0xff]
        %2395 = vset.pattern.permute.xlu0 0
        %2396 = vperm.xlu0 %2395, %v2392
        %v2397 = vpop.permute.xlu0 %2396
        %2400 = vset.pattern.permute.xlu0 0
        %2401 = vperm.xlu0 %2400, %v2393
        %v2402 = vpop.permute.xlu0 %2401
        %v2405 = vsel %vm587, %v2389, 0
        %v2408 = vsel %vm587, %v2390, 0
        %2410 = vmatprep.subr.mxu0 %v2344
        %2411 = vmatpush1.msra.mxu0 %v2342
        %2412 = vmatprep.subr.mxu0 %v2350
        %2413 = vmatpush1.msra.mxu0 %v2348
        %2414 = vmatprep.subr.mxu0 %v2356
        %2415 = vmatpush1.msra.mxu0 %v2354
        %2416 = vmatprep.subr.mxu0 %v2362
        %2417 = vmatpush1.msra.mxu0 %v2360
        %2418 = vmatprep.subr.mxu0 %v2368
        %2419 = vmatpush1.msra.mxu0 %v2366
        %2420 = vmatprep.subr.mxu0 %v2374
        %2421 = vmatpush1.msra.mxu0 %v2372
        %2422 = vmatprep.subr.mxu0 %v2380
        %2423 = vmatpush1.msra.mxu0 %v2378
        %2424 = vmatprep.subr.mxu0 %v2386
        %2425 = vmatpush1.msra.mxu0 %v2384
        %2426 = vmatprep.subr.mxu0 0.0
        %2427 = vmatpush1.msra.mxu0 0.0
        %2428 = vmatprep.subr.mxu0 0.0
        %2429 = vmatpush1.msra.mxu0 0.0
        %2430 = vmatprep.subr.mxu0 0.0
        %2431 = vmatpush1.msra.mxu0 0.0
        %2432 = vmatprep.subr.mxu0 0.0
        %2433 = vmatpush1.msra.mxu0 0.0
        %2434 = vmatprep.subr.mxu0 0.0
        %2435 = vmatpush1.msra.mxu0 0.0
        %2436 = vmatprep.subr.mxu0 0.0
        %2437 = vmatpush1.msra.mxu0 0.0
        %2438 = vmatprep.subr.mxu0 0.0
        %2439 = vmatpush1.msra.mxu0 0.0
        %2440 = vmatprep.subr.mxu0 0.0
        %2441 = vmatpush1.msra.mxu0 0.0
        %2442 = vmatprep.subr.mxu0 0.0
        %2443 = vmatpush1.msra.mxu0 0.0
        %2444 = vmatprep.subr.mxu0 0.0
        %2445 = vmatpush1.msra.mxu0 0.0
        %2446 = vmatprep.subr.mxu0 0.0
        %2447 = vmatpush1.msra.mxu0 0.0
        %2448 = vmatprep.subr.mxu0 0.0
        %2449 = vmatpush1.msra.mxu0 0.0
        %2450 = vmatprep.subr.mxu0 0.0
        %2451 = vmatpush1.msra.mxu0 0.0
        %2452 = vmatprep.subr.mxu0 0.0
        %2453 = vmatpush1.msra.mxu0 0.0
        %2454 = vmatprep.subr.mxu0 0.0
        %2455 = vmatpush1.msra.mxu0 0.0
        %2456 = vmatprep.subr.mxu0 0.0
        %2457 = vmatpush1.msra.mxu0 0.0
        %2458 = vmatprep.subr.mxu0 0.0
        %2459 = vmatpush1.msra.mxu0 0.0
        %2460 = vmatprep.subr.mxu0 0.0
        %2461 = vmatpush1.msra.mxu0 0.0
        %2462 = vmatprep.subr.mxu0 0.0
        %2463 = vmatpush1.msra.mxu0 0.0
        %2464 = vmatprep.subr.mxu0 0.0
        %2465 = vmatpush1.msra.mxu0 0.0
        %2466 = vmatprep.subr.mxu0 0.0
        %2467 = vmatpush1.msra.mxu0 0.0
        %2468 = vmatprep.subr.mxu0 0.0
        %2469 = vmatpush1.msra.mxu0 0.0
        %2470 = vmatprep.subr.mxu0 0.0
        %2471 = vmatpush1.msra.mxu0 0.0
        %2472 = vmatprep.subr.mxu0 0.0
        %2473 = vmatpush1.msra.mxu0 0.0
        %2474 = vmatprep.mubr.f32.mxu0 0.0
        %2475 = vmatmul.mubr.f32.gmra.mrb[0].mxu0 %v2405
        %v2476 = vpop.f32.mrb[0].mxu0
        %v2477 = vadd.f32 %v2397, %v2476
        %v2478 = vpop.f32.mrb[0].mxu0
        %v2479 = vadd.f32 %v2397, %v2478
        %2480 = vmatprep.mubr.f32.mxu0 0.0
        %2481 = vmatmul.mubr.f32.gmra.mrb[0].mxu0 %v2408
        %v2482 = vpop.f32.mrb[0].mxu0
        %v2483 = vadd.f32 %v2402, %v2482
        %v2484 = vpop.f32.mrb[0].mxu0
        %v2485 = vadd.f32 %v2402, %v2484
        %2486 = vdwg.mxu0
        %v2487 = vsub.f32 0.0, %v2477
        %v2488 = vsub.f32 0.0, %v2479
        %v2489 = vmul.f32 %v2487, 1.442695
        %v2490 = vpow.pop %v2489
        %v2491 = vmul.f32 %v2488, 1.442695
        %v2492 = vpow.pop %v2491
        %v2493 = vsub.f32 %v1767, %v2483
        %v2494 = vsub.f32 %v1768, %v2485
        %v2495 = vmul.f32 %v2490, %v2493
        %v2496 = vmul.f32 %v2492, %v2494
        %v2497 = vsub.f32 %v1769, %v2477
        %v2498 = vsub.f32 %v1770, %v2479
        %2499 = vst [vmem:[%s303] sm:$0xff] %v2495
        %2500 = vst [vmem:[%s303 + $0x8] sm:$0xff] %v2496
        %2501 = vst [vmem:[%s310] sm:$0xff] %v2497
        %2502 = vst [vmem:[%s310 + $0x8] sm:$0xff] %v2498
        %s2503 = sand.u32 %s186, 1
        %s2504 = scalar_lea.sflag [#allocation3], %s2503
        %s2505 = sand.u32 %s186, 1
        %s2506 = smul.addr %s2505, 16
        %s2507 = scalar_lea.vmem [#allocation2], %s2506
        %s2508 = sand.u32 %s212, 1
        %s2509 = scalar_lea.sflag [#allocation5], %s2508
        %s2510 = sand.u32 %s212, 1
        %s2511 = smul.addr %s2510, 16
        %s2512 = scalar_lea.vmem [#allocation4], %s2511
        // Predicated region
        $region49: #{tpu_custom_call.1} parent=47 // pred_check
          %p2513 = pneg %p196
        $region50: #{tpu_custom_call.1} parent=47 // pred_check_branch
          %2515 = sbr.rel (%p2513) target = $region52
        $region51: #{tpu_custom_call.1} parent=47 // pred_region
          %s2516 = smul.u32 2, %s26
          %s2518 = ssub.s32 256, 256
          %2519 = vsyncadd %s2504, %s2518
          %s2520 = smul.addr %s2516, 128
          %s2521 = scalar_lea.hbm %s7, %s2520
          %s2523 = sshll.u32 %s2507, 4
          %s2524 = int_to_ptr.vmem [resolvable:$true] %s2523
          %2526 = dma.vmem_to_hbm [thread:$0]  %s2524, 256, %s2521, %s2504
        $region52: #{tpu_custom_call.1} parent=47 // pred_fallthru
          _
        // Predicated region
        $region53: #{tpu_custom_call.1} parent=47 // pred_check
          %p2527 = pneg %p222
        $region54: #{tpu_custom_call.1} parent=47 // pred_check_branch
          %2529 = sbr.rel (%p2527) target = $region56
        $region55: #{tpu_custom_call.1} parent=47 // pred_region
          %s2530 = smul.u32 2, %s26
          %s2532 = ssub.s32 256, 256
          %2533 = vsyncadd %s2509, %s2532
          %s2534 = smul.addr %s2530, 128
          %s2535 = scalar_lea.hbm %s8, %s2534
          %s2537 = sshll.u32 %s2512, 4
          %s2538 = int_to_ptr.vmem [resolvable:$true] %s2537
          %2540 = dma.vmem_to_hbm [thread:$0]  %s2538, 256, %s2535, %s2509
        $region56: #{tpu_custom_call.1} parent=47 // pred_fallthru
          _
      $region48: #{tpu_custom_call.1} parent=5 // pred_fallthru
        _
      %p2541 = scmp.le.s32.totalorder 2, %s21
      // Predicated region
      $region57: #{tpu_custom_call.1} parent=5 // pred_check
        %p2542 = pneg %p2541
      $region58: #{tpu_custom_call.1} parent=5 // pred_check_branch
        %2544 = sbr.rel (%p2542) target = $region60
      $region59: #{tpu_custom_call.1} parent=5 // pred_region
        %s2545 = ssub.s32 %s21, 2
        // Predicated region
        $region61: #{tpu_custom_call.1} parent=59 // pred_check
          %p2546 = pneg %p202
        $region62: #{tpu_custom_call.1} parent=59 // pred_check_branch
          %2548 = sbr.rel (%p2546) target = $region64
        $region63: #{tpu_custom_call.1} parent=59 // pred_region
          %s2549 = sand.u32 %s187, 1
          %s2550 = scalar_lea.sflag [#allocation3], %s2549
          %s2551 = sand.u32 %s187, 1
          %s2552 = smul.addr %s2551, 16
          %s2553 = scalar_lea.vmem [#allocation2], %s2552
          %2554 = dma.done %s2550, 256
        $region64: #{tpu_custom_call.1} parent=59 // pred_fallthru
          _
        // Predicated region
        $region65: #{tpu_custom_call.1} parent=59 // pred_check
          %p2555 = pneg %p228
        $region66: #{tpu_custom_call.1} parent=59 // pred_check_branch
          %2557 = sbr.rel (%p2555) target = $region68
        $region67: #{tpu_custom_call.1} parent=59 // pred_region
          %s2558 = sand.u32 %s213, 1
          %s2559 = scalar_lea.sflag [#allocation5], %s2558
          %s2560 = sand.u32 %s213, 1
          %s2561 = smul.addr %s2560, 16
          %s2562 = scalar_lea.vmem [#allocation4], %s2561
          %2563 = dma.done %s2559, 256
        $region68: #{tpu_custom_call.1} parent=59 // pred_fallthru
          _
      $region60: #{tpu_custom_call.1} parent=5 // pred_fallthru
        _
    $region6: #{tpu_custom_call.1} parent=1 // loop_footer
      %s25 = sadd.s32 1, %s21
    $region7: #{tpu_custom_call.1} parent=1 // loop_footer_branch
      %20 = sbr.rel target = $region3
    $region8: #{tpu_custom_call.1} parent=1 // loop_exit
      _
    %2564 = vsyncpa [#allocation3], 1
    %s2565 = scalar_lea.sflag [#allocation3], 1
    %2566 = vsyncpa %s2565, 1
    %2567 = vsyncpa [#allocation5], 1
    %s2568 = scalar_lea.sflag [#allocation5], 1
    %2569 = vsyncpa %s2568, 1

</llo_original>
